<compile_context>
chip_gen: v5e
topology: v5e:2x2
jax: 0.10.0
libtpu: 0.0.40
codegen_flags: <defaults>
</compile_context>

<pallas_src>
import functools

import numpy as np

import jax
import jax.numpy as jnp
from jax.experimental import pallas as pl
from jax.experimental.pallas import tpu as pltpu

_EPS = 1e-5
_MIB = 1024 * 1024
# Use the single-matmul Kronecker resize when kron(Mh, Mw) (bf16) fits this
# budget and the per-output-element MXU work (2*h*w flops) stays small enough
# to hide under the HBM stream even on v5e.
_KRON_MAX_BYTES = 8 * _MIB
_KRON_MAX_HW = 512


# ----------------------------- hardware / tiling ------------------------------

def _round_up(v, m):
    return -(-v // m) * m


def _vmem_physical_bytes():
    """Physical VMEM per TensorCore (v5e/v6e: 128 MiB, v7x: 64 MiB)."""
    try:
        v = int(pltpu.get_tpu_info().vmem_capacity_bytes)
        if v > 0:
            return v
    except Exception:
        pass
    kind = ""
    try:
        kind = jax.devices()[0].device_kind.lower()
    except Exception:
        pass
    if any(t in kind for t in ("v5 lite", "v5e", "v5litepod", "v6", "trillium")):
        return 128 * _MIB
    return 64 * _MIB          # conservative default (v7x per-core VMEM)


def _pick_channel_tile(nc, per_channel_bytes, budget_bytes, min_steps=4):
    """Channels of the flattened N*C axis per grid step.

    Largest divisor of `nc` whose padded VMEM working set fits `budget_bytes`,
    preferring an even grid of >= `min_steps` steps so both v7x TensorCores get
    >= 2 pipelined steps each (falls back to >= 2 steps, then a single step for
    tiny inputs)."""
    cap = max(1, budget_bytes // max(per_channel_bytes, 1))
    divs = [t for t in range(1, nc + 1) if nc % t == 0]
    cands = [t for t in divs if t <= cap] or [divs[0]]
    for pred in (lambda g: g >= min_steps and g % 2 == 0,
                 lambda g: g >= 2,
                 lambda g: True):
        ok = [t for t in cands if pred(nc // t)]
        if ok:
            return max(ok)
    return cands[-1]
    # TODO(synk): if N*C has no convenient divisor (e.g. prime), pad N*C up to a
    # multiple of a good tile instead of degrading to tiny blocks.


def _compiler_params(vmem_limit):
    return pltpu.CompilerParams(dimension_semantics=("parallel",),
                                vmem_limit_bytes=int(vmem_limit))


# ------------------------------ in-kernel helpers -----------------------------

def _mish(z):
    # mish(z) = z * tanh(softplus(z)) with a single exp:
    #   tanh(log(1 + e^z)) = ((1 + e^z)^2 - 1) / ((1 + e^z)^2 + 1)
    # exp is clamped at 20 (the ratio is exactly 1.0 in f32 there); the divide
    # uses the EUP approximate reciprocal (separate issue slot -> nearly free).
    e = jnp.exp(jnp.minimum(z, 20.0))
    q = (1.0 + e) * (1.0 + e)
    return z * (q - 1.0) * pl.reciprocal(q + 1.0, approx=True)


# ------------------- kernel 1: pooled statistics (one x pass) -----------------
# All four pooled vectors are linear in x, so per channel they are produced by
# one matmul against a precomputed matrix (pooled resize uses the row/column
# means of the bilinear matrices; resize(x) itself is never built here).

def _pool_kernel(x_ref, p_ref, o_ref):
    xb = x_ref[0].astype(jnp.bfloat16)                       # (tc, h*w)
    o_ref[0] = jnp.dot(xb, p_ref[...], preferred_element_type=jnp.float32)


def pooled_stats(x2, pmat):
    NC, hw = x2.shape
    L = pmat.shape[1]
    hw_p, L_p = _round_up(hw, 128), _round_up(L, 128)
    per_c = 2 * 4 * hw_p + 2 * hw_p + 3 * 4 * L_p            # x dbl + bf16 cast + out
    fixed = 2 * 2 * _round_up(hw, 16) * L_p + _MIB            # P (dbl, bf16) + slack
    phys = _vmem_physical_bytes()
    tc = _pick_channel_tile(NC, per_c, max(phys * 5 // 8 - fixed, per_c))
    G = NC // tc
    vmem_limit = min(phys * 3 // 4, max(fixed + tc * per_c + 4 * _MIB, 32 * _MIB))
    out = pl.pallas_call(
        _pool_kernel,
        grid=(G,),
        in_specs=[
            pl.BlockSpec((1, tc, hw), lambda i: (i, 0, 0)),
            pl.BlockSpec((hw, L), lambda i: (0, 0)),
        ],
        out_specs=pl.BlockSpec((1, tc, L), lambda i: (i, 0, 0)),
        out_shape=jax.ShapeDtypeStruct((G, tc, L), jnp.float32),
        compiler_params=_compiler_params(vmem_limit),
    )(x2.reshape(G, tc, hw), pmat)
    return out.reshape(NC, L)


# ------------- kernel 2a: fused resize + gate + Mish (Kronecker path) ---------
#   out_flat = x_flat @ kron(Mh, Mw)^T      (tc, H*W)   one lane-dense matmul
#   gate     = (sgh @ Eh) * (sgw @ Ew)      rank-1 gate expanded via two tiny
#                                           0/1 matmuls (K = H / W)
#   y        = mish(out * (1 + gate))
# Everything is lane-dense with H*W lanes (multiple of 128): unmasked stores,
# no Mh broadcast, no batched tiny-K matmuls.

def _fuse_kron_kernel(x_ref, mk_ref, eh_ref, ew_ref, sgh_ref, sgw_ref, y_ref):
    xb = x_ref[0].astype(jnp.bfloat16)                                   # (tc, h*w)
    out = jnp.dot(xb, mk_ref[...], preferred_element_type=jnp.float32)   # (tc, H*W)
    gh = jnp.dot(sgh_ref[0].astype(jnp.bfloat16), eh_ref[...],
                 preferred_element_type=jnp.float32)                     # (tc, H*W)
    gw = jnp.dot(sgw_ref[0].astype(jnp.bfloat16), ew_ref[...],
                 preferred_element_type=jnp.float32)                     # (tc, H*W)
    y_ref[0] = _mish(out * (1.0 + gh * gw)).astype(y_ref.dtype)


def resize_gate_fuse_kron(x2, mk, eh, ew, sgh2, sgw2, out_dtype):
    NC, hw = x2.shape
    HW = mk.shape[1]
    H, W = eh.shape[0], ew.shape[0]
    hw_p, HW_p = _round_up(hw, 128), _round_up(HW, 128)
    H_p, W_p = _round_up(H, 128), _round_up(W, 128)
    ob = np.dtype(out_dtype).itemsize
    per_c = (2 * 4 * hw_p + 2 * hw_p          # x (double-buffered f32) + bf16 cast
             + 2 * ob * HW_p                  # y (double-buffered)
             + 6 * 4 * HW_p                   # out / gate / mish f32 temps
             + 10 * (H_p + W_p))              # sgh / sgw blocks + casts
    fixed = (2 * 2 * (_round_up(hw, 16) + _round_up(H, 16) + _round_up(W, 16)) * HW_p
             + _MIB)                          # Mk, Eh, Ew (dbl, bf16) + slack
    phys = _vmem_physical_bytes()
    tc = _pick_channel_tile(NC, per_c, max(phys * 5 // 8 - fixed, per_c))
    G = NC // tc
    vmem_limit = min(phys * 3 // 4, max(fixed + tc * per_c + 4 * _MIB, 32 * _MIB))
    y = pl.pallas_call(
        _fuse_kron_kernel,
        grid=(G,),
        in_specs=[
            pl.BlockSpec((1, tc, hw), lambda i: (i, 0, 0)),
            pl.BlockSpec((hw, HW), lambda i: (0, 0)),
            pl.BlockSpec((H, HW), lambda i: (0, 0)),
            pl.BlockSpec((W, HW), lambda i: (0, 0)),
            pl.BlockSpec((1, tc, H), lambda i: (i, 0, 0)),
            pl.BlockSpec((1, tc, W), lambda i: (i, 0, 0)),
        ],
        out_specs=pl.BlockSpec((1, tc, HW), lambda i: (i, 0, 0)),
        out_shape=jax.ShapeDtypeStruct((G, tc, HW), out_dtype),
        compiler_params=_compiler_params(vmem_limit),
    )(x2.reshape(G, tc, hw), mk, eh, ew,
      sgh2.reshape(G, tc, H), sgw2.reshape(G, tc, W))
    return y.reshape(NC, HW)


# ----------- kernel 2b: fused resize + gate + Mish (separable fallback) -------
# Used only when kron(Mh, Mw) would be too large for VMEM (big spatial sizes).
# Width pass is a single flat matmul; the height pass still uses a
# channel-batched matmul.
# TODO(synk): replace the height pass with a 2-tap bilinear lerp on the VPU
# (Mh has exactly two nonzeros per row) to avoid the per-channel Mh broadcast
# and the tiny-K batched matmuls.

def _fuse_sep_kernel(x_ref, mh_ref, mwt_ref, sgh_ref, sgw_ref, y_ref):
    _, tc, h, w = x_ref.shape
    H, W = mh_ref.shape[0], mwt_ref.shape[1]
    xb = x_ref[0].astype(jnp.bfloat16)                                   # (tc, h, w)
    t = jnp.dot(xb.reshape(tc * h, w), mwt_ref[...],
                preferred_element_type=jnp.float32).reshape(tc, h, W)
    mh_b = jnp.broadcast_to(mh_ref[...][None], (tc, H, h))
    out = jnp.einsum('cab,cbd->cad', mh_b, t.astype(jnp.bfloat16),
                     preferred_element_type=jnp.float32)                 # (tc, H, W)
    z = out * (1.0 + sgh_ref[0][:, :, None] * sgw_ref[0][:, None, :])
    y_ref[0] = _mish(z).astype(y_ref.dtype)


def resize_gate_fuse_sep(x3, mh_b16, mwt_b16, sgh2, sgw2, out_dtype):
    NC, h, w = x3.shape
    H, W = mh_b16.shape[0], mwt_b16.shape[1]
    w_p, W_p = _round_up(w, 128), _round_up(W, 128)
    h_lp, H_lp = _round_up(h, 128), _round_up(H, 128)
    ob = np.dtype(out_dtype).itemsize
    per_c = (2 * 4 * h * w_p + 2 * h * w_p    # x (dbl f32) + bf16 cast
             + 6 * h * W_p                    # width-pass result + bf16 copy
             + 2 * H * h_lp                   # per-channel Mh broadcast (bf16)
             + 5 * 4 * H * W_p                # out / gate / mish f32 temps
             + 2 * ob * H * W_p               # y (double-buffered)
             + 8 * (H_lp + W_p))              # sgh / sgw blocks
    fixed = 2 * 2 * (H * h_lp + _round_up(w, 16) * W_p) + _MIB
    phys = _vmem_physical_bytes()
    tc = _pick_channel_tile(NC, per_c, max(phys * 5 // 8 - fixed, per_c))
    G = NC // tc
    vmem_limit = min(phys * 3 // 4, max(fixed + tc * per_c + 4 * _MIB, 32 * _MIB))
    y = pl.pallas_call(
        _fuse_sep_kernel,
        grid=(G,),
        in_specs=[
            pl.BlockSpec((1, tc, h, w), lambda i: (i, 0, 0, 0)),
            pl.BlockSpec((H, h), lambda i: (0, 0)),
            pl.BlockSpec((w, W), lambda i: (0, 0)),
            pl.BlockSpec((1, tc, H), lambda i: (i, 0, 0)),
            pl.BlockSpec((1, tc, W), lambda i: (i, 0, 0)),
        ],
        out_specs=pl.BlockSpec((1, tc, H, W), lambda i: (i, 0, 0, 0)),
        out_shape=jax.ShapeDtypeStruct((G, tc, H, W), out_dtype),
        compiler_params=_compiler_params(vmem_limit),
    )(x3.reshape(G, tc, h, w), mh_b16, mwt_b16,
      sgh2.reshape(G, tc, H), sgw2.reshape(G, tc, W))
    return y.reshape(NC, H, W)


# --------------------------------- XLA glue ------------------------------------

def bilinear_matrix(out_size, in_size, align_corners):
    """Interpolation matrix matching F.interpolate(mode='bilinear')."""
    if align_corners and out_size > 1:
        if in_size == 1:
            src = np.zeros((out_size,), np.float32)
        else:
            src = np.arange(out_size, dtype=np.float32) * (in_size - 1) / (out_size - 1)
    else:
        scale = in_size / out_size
        src = (np.arange(out_size, dtype=np.float32) + 0.5) * scale - 0.5
        src = np.maximum(src, 0.0)
    i0 = np.clip(np.floor(src).astype(np.int64), 0, in_size - 1)
    i1 = np.clip(i0 + 1, 0, in_size - 1)
    lam = (src - i0).astype(np.float32)
    eye = np.eye(in_size, dtype=np.float32)
    return eye[i0] * (1.0 - lam)[:, None] + eye[i1] * lam[:, None]    # (out, in)


def conv0_1d(seq, w3, scale, bias):
    """3x3 conv (padding=1) on a width-1 / height-1 pooled map == 3-tap 1D conv.
    seq: (n, c, L); w3: (c*ratio, c, 3) taps; BN folded into scale/bias."""
    _, _, L = seq.shape
    padded = jnp.pad(seq, ((0, 0), (0, 0), (1, 1)))
    y = sum(jnp.einsum("oi,nil->nol", w3[:, :, k], padded[:, :, k:k + L])
            for k in range(3))
    return y * scale[None, :, None] + bias[None, :, None]


def interleave(y, ratio):
    """einops 'b (c n) l -> b c (l n)' with n=ratio."""
    n_, cr, L = y.shape
    c_ = cr // ratio
    return y.reshape(n_, c_, ratio, L).transpose(0, 1, 3, 2).reshape(n_, c_, L * ratio)


def _mish_xla(z):
    return z * jnp.tanh(jax.nn.softplus(z))


def gate_mlp(vh, vw, p):
    """conv1(1x1)+BN1+Mish -> conv_h/conv_w(1x1)+bias -> sigmoid.
    Tiny (n, c, H)/(n, c, W) tensors: plain XLA is cheaper than a Pallas grid."""
    inv = p["bn1_gamma"] / jnp.sqrt(p["bn1_var"] + _EPS)
    b1 = p["bn1_beta"] - p["bn1_mean"] * inv

    def head(v, wout, bout):
        t = jnp.einsum("km,nkl->nml", p["w1"], v)
        t = _mish_xla(t * inv[None, :, None] + b1[None, :, None])
        g = jnp.einsum("mc,nml->ncl", wout, t) + bout[None, :, None]
        return jax.nn.sigmoid(g)

    return head(vh, p["wh"], p["bh"]), head(vw, p["ww"], p["bw"])


def revolution_forward(x, p, *, ratio, align_corners, out_dtype=None,
                       force_separable=False):
    n, c, h, w = x.shape
    H, W = h * ratio, w * ratio
    NC = n * c
    out_dtype = x.dtype if out_dtype is None else out_dtype

    # bilinear matrices and derived constants (numpy -> baked into the program)
    mh = bilinear_matrix(H, h, align_corners)                 # (H, h)
    mw = bilinear_matrix(W, w, align_corners)                 # (W, w)
    mh_mean = mh.mean(axis=0)                                 # (h,)
    mw_mean = mw.mean(axis=0)                                 # (w,)

    # pooled-statistics matrix:
    #   x_flat @ P == [pool_h(x) | pool_w(x) | pool_h(resize(x)) | pool_w(resize(x))]
    pmat = np.concatenate([
        np.kron(np.eye(h, dtype=np.float32), np.ones((w, 1), np.float32)) / w,
        np.kron(np.ones((h, 1), np.float32), np.eye(w, dtype=np.float32)) / h,
        np.kron(mh.T, mw_mean.reshape(w, 1)),
        np.kron(mh_mean.reshape(h, 1), mw.T),
    ], axis=1)                                                # (h*w, h+w+H+W)

    x2 = x.reshape(NC, h * w)

    # 1) pooled statistics of x and of resize(x) — one HBM pass over x
    pooled = pooled_stats(x2, jnp.asarray(pmat, dtype=jnp.bfloat16))  # (NC, L)
    pxh = pooled[:, :h].reshape(n, c, h)
    pxw = pooled[:, h:h + w].reshape(n, c, w)
    poh = pooled[:, h + w:h + w + H].reshape(n, c, H)
    pow_ = pooled[:, h + w + H:].reshape(n, c, W)

    # 2) conv0 + BN0 + einops interleave on tiny pooled tensors (XLA glue)
    s0 = p["bn0_gamma"] / jnp.sqrt(p["bn0_var"] + _EPS)
    b0 = p["bn0_beta"] - p["bn0_mean"] * s0
    xh0 = conv0_1d(pxh, p["w0"][:, :, :, 1], s0, b0)          # (n, c*ratio, h)
    xw0 = conv0_1d(pxw, p["w0"][:, :, 1, :], s0, b0)          # (n, c*ratio, w)
    if ratio != 1:
        xh0 = interleave(xh0, ratio)                          # (n, c, H)
        xw0 = interleave(xw0, ratio)                          # (n, c, W)

    vh = jnp.concatenate([xh0, poh], axis=1)                  # (n, 2c, H)
    vw = jnp.concatenate([xw0, pow_], axis=1)                 # (n, 2c, W)

    # 3) gate MLP -> sigmoid gates, lane-major (·, H) / (·, W)
    sgh, sgw = gate_mlp(vh, vw, p)                            # (n,c,H), (n,c,W)
    sgh2 = sgh.reshape(NC, H)
    sgw2 = sgw.reshape(NC, W)

    # 4) fused resize + gating + Mish at full resolution
    use_kron = ((not force_separable)
                and h * w <= _KRON_MAX_HW
                and 2 * (h * w) * (H * W) <= _KRON_MAX_BYTES)
    if use_kron:
        mk = jnp.asarray(np.kron(mh.T, mw.T), dtype=jnp.bfloat16)        # (h*w, H*W)
        eh = jnp.asarray(np.kron(np.eye(H, dtype=np.float32),
                                 np.ones((1, W), np.float32)), dtype=jnp.bfloat16)
        ew = jnp.asarray(np.kron(np.ones((1, H), np.float32),
                                 np.eye(W, dtype=np.float32)), dtype=jnp.bfloat16)
        y2 = resize_gate_fuse_kron(x2, mk, eh, ew, sgh2, sgw2, out_dtype)
        return y2.reshape(n, c, H, W)
    y3 = resize_gate_fuse_sep(x.reshape(NC, h, w),
                              jnp.asarray(mh, dtype=jnp.bfloat16),
                              jnp.asarray(mw.T, dtype=jnp.bfloat16),
                              sgh2, sgw2, out_dtype)
    return y3.reshape(n, c, H, W)


# ------------------------------ params & reference ----------------------------

def init_params(key, channels, ratio):
    mip = max(64, channels // 4)
    ks = jax.random.split(key, 14)
    p = {}
    # conv0: (c*ratio, c, 3, 3), no bias (has norm) + BN0
    p["w0"] = 0.1 * jax.random.normal(ks[0], (channels * ratio, channels, 3, 3), jnp.float32)
    p["bn0_gamma"] = 1.0 + 0.1 * jax.random.normal(ks[1], (channels * ratio,), jnp.float32)
    p["bn0_beta"] = 0.1 * jax.random.normal(ks[2], (channels * ratio,), jnp.float32)
    p["bn0_mean"] = 0.1 * jax.random.normal(ks[3], (channels * ratio,), jnp.float32)
    p["bn0_var"] = 1.0 + 0.1 * jnp.abs(jax.random.normal(ks[4], (channels * ratio,), jnp.float32))
    # conv1: 1x1, 2c -> mip (stored as (in, out)) + BN1
    p["w1"] = 0.1 * jax.random.normal(ks[5], (2 * channels, mip), jnp.float32)
    p["bn1_gamma"] = 1.0 + 0.1 * jax.random.normal(ks[6], (mip,), jnp.float32)
    p["bn1_beta"] = 0.1 * jax.random.normal(ks[7], (mip,), jnp.float32)
    p["bn1_mean"] = 0.1 * jax.random.normal(ks[8], (mip,), jnp.float32)
    p["bn1_var"] = 1.0 + 0.1 * jnp.abs(jax.random.normal(ks[9], (mip,), jnp.float32))
    # conv_h / conv_w: 1x1, mip -> c, with bias (stored as (in, out))
    p["wh"] = 0.1 * jax.random.normal(ks[10], (mip, channels), jnp.float32)
    p["ww"] = 0.1 * jax.random.normal(ks[11], (mip, channels), jnp.float32)
    p["bh"] = 0.1 * jax.random.normal(ks[12], (channels,), jnp.float32)
    p["bw"] = 0.1 * jax.random.normal(ks[13], (channels,), jnp.float32)
    return p


def revolution_reference(x, p, *, ratio, align_corners):
    """Pure-JAX (f32, XLA-only) reference of the PyTorch forward (eval-mode BN)."""
    n, c, h, w = x.shape
    H, W = h * ratio, w * ratio
    mh = bilinear_matrix(H, h, align_corners)                 # (H, h)
    mw = bilinear_matrix(W, w, align_corners)                 # (W, w)
    out = jnp.einsum('Hh,nchw,Ww->ncHW', mh, x, mw)

    s0 = p["bn0_gamma"] / jnp.sqrt(p["bn0_var"] + _EPS)
    b0 = p["bn0_beta"] - p["bn0_mean"] * s0
    xh0 = conv0_1d(x.mean(axis=3), p["w0"][:, :, :, 1], s0, b0)
    xw0 = conv0_1d(x.mean(axis=2), p["w0"][:, :, 1, :], s0, b0)
    if ratio != 1:
        xh0 = interleave(xh0, ratio)
        xw0 = interleave(xw0, ratio)
    vh = jnp.concatenate([xh0, out.mean(axis=3)], axis=1)     # (n, 2c, H)
    vw = jnp.concatenate([xw0, out.mean(axis=2)], axis=1)     # (n, 2c, W)

    sgh, sgw = gate_mlp(vh, vw, p)                            # (n,c,H), (n,c,W)
    g = out * sgw[:, :, None, :] * sgh[:, :, :, None]
    return _mish_xla(g + out)


if __name__ == "__main__":
    key = jax.random.PRNGKey(0)
    kx, kp = jax.random.split(key)

    n, c, h, w = 2, 4, 16, 16
    ratio = 2
    align_corners = False

    x = jax.random.normal(kx, (n, c, h, w), jnp.float32)
    params = init_params(kp, c, ratio)

    fwd = jax.jit(functools.partial(revolution_forward, ratio=ratio,
                                    align_corners=align_corners))
    y = fwd(x, params)
    jax.block_until_ready(y)
    assert y.shape == (n, c, h * ratio, w * ratio)
    assert bool(jnp.all(jnp.isfinite(y)))

    # Cross-check against a pure-JAX f32 reference.  The Pallas path uses bf16
    # MXU operands (f32 accumulation) and an approximate reciprocal in Mish, so
    # use a per-element rel+abs tolerance (layout/indexing bugs would be O(1)).
    y_ref = jax.jit(functools.partial(revolution_reference, ratio=ratio,
                                      align_corners=align_corners))(x, params)
    err = jnp.abs(y - y_ref)
    tol = 0.05 + 0.05 * jnp.abs(y_ref)
    assert bool(jnp.all(err <= tol)), f"max abs err {float(jnp.max(err))}"
    assert float(jnp.mean(err)) < 0.01, f"mean abs err {float(jnp.mean(err))}"

    # Also exercise the large-spatial separable fallback path at the same shape.
    fwd_sep = jax.jit(functools.partial(revolution_forward, ratio=ratio,
                                        align_corners=align_corners,
                                        force_separable=True))
    y2 = fwd_sep(x, params)
    jax.block_until_ready(y2)
    err2 = jnp.abs(y2 - y_ref)
    assert bool(jnp.all(err2 <= tol)), f"fallback max abs err {float(jnp.max(err2))}"

    print("KERNEL_OK")
</pallas_src>

<mosaic_0001>
module attributes {stable_mosaic.version = 11 : i64} {
  func.func @_pool_kernel(%arg0: i32, %arg1: memref<1x2x256xf32, #tpu.memory_space<vmem>>, %arg2: memref<256x96xbf16, #tpu.memory_space<vmem>>, %arg3: memref<1x2x96xf32, #tpu.memory_space<vmem>>) attributes {dimension_semantics = [#tpu.dimension_semantics<parallel>], iteration_bounds = array<i64: 4>, scalar_prefetch = 0 : i64, scratch_operands = 0 : i64, tpu.core_type = #tpu.core_type<tc>, window_params = [{transform_indices = @transform_0, window_bounds = array<i64: 1, 2, 256>}, {pipeline_mode = #tpu.pipeline_mode<synchronous>, transform_indices = @transform_1, window_bounds = array<i64: 256, 96>}, {transform_indices = @transform_2, window_bounds = array<i64: 1, 2, 96>}]} {
    %c0 = arith.constant 0 : index
    %c0_0 = arith.constant 0 : index
    %c0_1 = arith.constant 0 : index
    %0 = vector.load %arg1[%c0, %c0_0, %c0_1] : memref<1x2x256xf32, #tpu.memory_space<vmem>>, vector<1x2x256xf32>
    %1 = vector.shape_cast %0 : vector<1x2x256xf32> to vector<2x256xf32>
    %2 = arith.truncf %1 : vector<2x256xf32> to vector<2x256xbf16>
    %c0_2 = arith.constant 0 : index
    %c0_3 = arith.constant 0 : index
    %3 = vector.load %arg2[%c0_2, %c0_3] : memref<256x96xbf16, #tpu.memory_space<vmem>>, vector<256x96xbf16>
    %cst = arith.constant dense<0.000000e+00> : vector<2x96xf32>
    %4 = tpu.matmul %2, %3, %cst {dimension_numbers = #tpu.dot_dimension_numbers<[1], [0], [0], [1], [0, 0, 1, 1], [], []>} : vector<2x256xbf16>, vector<256x96xbf16>, vector<2x96xf32> -> vector<2x96xf32>
    %c0_4 = arith.constant 0 : index
    %c0_5 = arith.constant 0 : index
    %c0_6 = arith.constant 0 : index
    %5 = vector.load %arg3[%c0_4, %c0_5, %c0_6] : memref<1x2x96xf32, #tpu.memory_space<vmem>>, vector<1x2x96xf32>
    %6 = vector.shape_cast %5 : vector<1x2x96xf32> to vector<2x96xf32>
    %7 = vector.shape_cast %4 : vector<2x96xf32> to vector<1x2x96xf32>
    tpu.vector_store %arg3[%c0_4, %c0_5, %c0_6], %7 {strides = array<i32>} : memref<1x2x96xf32, #tpu.memory_space<vmem>>, vector<1x2x96xf32>,
    return
  }
  func.func @transform_0(%arg0: i32) -> (i32, i32, i32) {
    %c0_i32 = arith.constant 0 : i32
    %c0_i32_0 = arith.constant 0 : i32
    %c0_i32_1 = arith.constant 0 : i32
    return %arg0, %c0_i32, %c0_i32_0 : i32, i32, i32
  }
  func.func @transform_1(%arg0: i32) -> (i32, i32) {
    %c0_i32 = arith.constant 0 : i32
    %c0_i32_0 = arith.constant 0 : i32
    %c0_i32_1 = arith.constant 0 : i32
    return %c0_i32, %c0_i32_0 : i32, i32
  }
  func.func @transform_2(%arg0: i32) -> (i32, i32, i32) {
    %c0_i32 = arith.constant 0 : i32
    %c0_i32_0 = arith.constant 0 : i32
    %c0_i32_1 = arith.constant 0 : i32
    return %arg0, %c0_i32, %c0_i32_0 : i32, i32, i32
  }
}

module attributes {stable_mosaic.version = 11 : i64} {
  func.func @_fuse_kron_kernel(%arg0: i32, %arg1: memref<1x2x256xf32, #tpu.memory_space<vmem>>, %arg2: memref<256x1024xbf16, #tpu.memory_space<vmem>>, %arg3: memref<32x1024xbf16, #tpu.memory_space<vmem>>, %arg4: memref<32x1024xbf16, #tpu.memory_space<vmem>>, %arg5: memref<1x2x32xf32, #tpu.memory_space<vmem>>, %arg6: memref<1x2x32xf32, #tpu.memory_space<vmem>>, %arg7: memref<1x2x1024xf32, #tpu.memory_space<vmem>>) attributes {dimension_semantics = [#tpu.dimension_semantics<parallel>], iteration_bounds = array<i64: 4>, scalar_prefetch = 0 : i64, scratch_operands = 0 : i64, tpu.core_type = #tpu.core_type<tc>, window_params = [{transform_indices = @transform_0, window_bounds = array<i64: 1, 2, 256>}, {pipeline_mode = #tpu.pipeline_mode<synchronous>, transform_indices = @transform_1, window_bounds = array<i64: 256, 1024>}, {pipeline_mode = #tpu.pipeline_mode<synchronous>, transform_indices = @transform_2, window_bounds = array<i64: 32, 1024>}, {pipeline_mode = #tpu.pipeline_mode<synchronous>, transform_indices = @transform_3, window_bounds = array<i64: 32, 1024>}, {transform_indices = @transform_4, window_bounds = array<i64: 1, 2, 32>}, {transform_indices = @transform_5, window_bounds = array<i64: 1, 2, 32>}, {transform_indices = @transform_6, window_bounds = array<i64: 1, 2, 1024>}]} {
    %c0 = arith.constant 0 : index
    %c0_0 = arith.constant 0 : index
    %c0_1 = arith.constant 0 : index
    %0 = vector.load %arg1[%c0, %c0_0, %c0_1] : memref<1x2x256xf32, #tpu.memory_space<vmem>>, vector<1x2x256xf32>
    %1 = vector.shape_cast %0 : vector<1x2x256xf32> to vector<2x256xf32>
    %2 = arith.truncf %1 : vector<2x256xf32> to vector<2x256xbf16>
    %c0_2 = arith.constant 0 : index
    %c0_3 = arith.constant 0 : index
    %3 = vector.load %arg2[%c0_2, %c0_3] : memref<256x1024xbf16, #tpu.memory_space<vmem>>, vector<256x1024xbf16>
    %cst = arith.constant dense<0.000000e+00> : vector<2x1024xf32>
    %4 = tpu.matmul %2, %3, %cst {dimension_numbers = #tpu.dot_dimension_numbers<[1], [0], [0], [1], [0, 0, 1, 1], [], []>} : vector<2x256xbf16>, vector<256x1024xbf16>, vector<2x1024xf32> -> vector<2x1024xf32>
    %c0_4 = arith.constant 0 : index
    %c0_5 = arith.constant 0 : index
    %c0_6 = arith.constant 0 : index
    %5 = vector.load %arg5[%c0_4, %c0_5, %c0_6] : memref<1x2x32xf32, #tpu.memory_space<vmem>>, vector<1x2x32xf32>
    %6 = vector.shape_cast %5 : vector<1x2x32xf32> to vector<2x32xf32>
    %7 = arith.truncf %6 : vector<2x32xf32> to vector<2x32xbf16>
    %c0_7 = arith.constant 0 : index
    %c0_8 = arith.constant 0 : index
    %8 = vector.load %arg3[%c0_7, %c0_8] : memref<32x1024xbf16, #tpu.memory_space<vmem>>, vector<32x1024xbf16>
    %cst_9 = arith.constant dense<0.000000e+00> : vector<2x1024xf32>
    %9 = tpu.matmul %7, %8, %cst_9 {dimension_numbers = #tpu.dot_dimension_numbers<[1], [0], [0], [1], [0, 0, 1, 1], [], []>} : vector<2x32xbf16>, vector<32x1024xbf16>, vector<2x1024xf32> -> vector<2x1024xf32>
    %c0_10 = arith.constant 0 : index
    %c0_11 = arith.constant 0 : index
    %c0_12 = arith.constant 0 : index
    %10 = vector.load %arg6[%c0_10, %c0_11, %c0_12] : memref<1x2x32xf32, #tpu.memory_space<vmem>>, vector<1x2x32xf32>
    %11 = vector.shape_cast %10 : vector<1x2x32xf32> to vector<2x32xf32>
    %12 = arith.truncf %11 : vector<2x32xf32> to vector<2x32xbf16>
    %c0_13 = arith.constant 0 : index
    %c0_14 = arith.constant 0 : index
    %13 = vector.load %arg4[%c0_13, %c0_14] : memref<32x1024xbf16, #tpu.memory_space<vmem>>, vector<32x1024xbf16>
    %cst_15 = arith.constant dense<0.000000e+00> : vector<2x1024xf32>
    %14 = tpu.matmul %12, %13, %cst_15 {dimension_numbers = #tpu.dot_dimension_numbers<[1], [0], [0], [1], [0, 0, 1, 1], [], []>} : vector<2x32xbf16>, vector<32x1024xbf16>, vector<2x1024xf32> -> vector<2x1024xf32>
    %15 = arith.mulf %9, %14 : vector<2x1024xf32>
    %cst_16 = arith.constant 1.000000e+00 : f32
    %16 = vector.broadcast %cst_16 : f32 to vector<2x1024xf32>
    %17 = arith.addf %16, %15 : vector<2x1024xf32>
    %18 = arith.mulf %4, %17 : vector<2x1024xf32>
    %cst_17 = arith.constant 2.000000e+01 : f32
    %19 = vector.broadcast %cst_17 : f32 to vector<2x1024xf32>
    %20 = arith.minimumf %18, %19 : vector<2x1024xf32>
    %21 = math.exp %20 : vector<2x1024xf32>
    %cst_18 = arith.constant 1.000000e+00 : f32
    %22 = vector.broadcast %cst_18 : f32 to vector<2x1024xf32>
    %23 = arith.addf %22, %21 : vector<2x1024xf32>
    %cst_19 = arith.constant 1.000000e+00 : f32
    %24 = vector.broadcast %cst_19 : f32 to vector<2x1024xf32>
    %25 = arith.addf %24, %21 : vector<2x1024xf32>
    %26 = arith.mulf %23, %25 : vector<2x1024xf32>
    %cst_20 = arith.constant 1.000000e+00 : f32
    %27 = vector.broadcast %cst_20 : f32 to vector<2x1024xf32>
    %28 = arith.subf %26, %27 : vector<2x1024xf32>
    %29 = arith.mulf %18, %28 : vector<2x1024xf32>
    %cst_21 = arith.constant 1.000000e+00 : f32
    %30 = vector.broadcast %cst_21 : f32 to vector<2x1024xf32>
    %31 = arith.addf %26, %30 : vector<2x1024xf32>
    %32 = tpu.reciprocal %31 {approx = true} : vector<2x1024xf32> -> vector<2x1024xf32>
    %33 = arith.mulf %29, %32 : vector<2x1024xf32>
    %c0_22 = arith.constant 0 : index
    %c0_23 = arith.constant 0 : index
    %c0_24 = arith.constant 0 : index
    %34 = vector.load %arg7[%c0_22, %c0_23, %c0_24] : memref<1x2x1024xf32, #tpu.memory_space<vmem>>, vector<1x2x1024xf32>
    %35 = vector.shape_cast %34 : vector<1x2x1024xf32> to vector<2x1024xf32>
    %36 = vector.shape_cast %33 : vector<2x1024xf32> to vector<1x2x1024xf32>
    tpu.vector_store %arg7[%c0_22, %c0_23, %c0_24], %36 {strides = array<i32>} : memref<1x2x1024xf32, #tpu.memory_space<vmem>>, vector<1x2x1024xf32>,
    return
  }
  func.func @transform_0(%arg0: i32) -> (i32, i32, i32) {
    %c0_i32 = arith.constant 0 : i32
    %c0_i32_0 = arith.constant 0 : i32
    %c0_i32_1 = arith.constant 0 : i32
    return %arg0, %c0_i32, %c0_i32_0 : i32, i32, i32
  }
  func.func @transform_1(%arg0: i32) -> (i32, i32) {
    %c0_i32 = arith.constant 0 : i32
    %c0_i32_0 = arith.constant 0 : i32
    %c0_i32_1 = arith.constant 0 : i32
    return %c0_i32, %c0_i32_0 : i32, i32
  }
  func.func @transform_2(%arg0: i32) -> (i32, i32) {
    %c0_i32 = arith.constant 0 : i32
    %c0_i32_0 = arith.constant 0 : i32
    %c0_i32_1 = arith.constant 0 : i32
    return %c0_i32, %c0_i32_0 : i32, i32
  }
  func.func @transform_3(%arg0: i32) -> (i32, i32) {
    %c0_i32 = arith.constant 0 : i32
    %c0_i32_0 = arith.constant 0 : i32
    %c0_i32_1 = arith.constant 0 : i32
    return %c0_i32, %c0_i32_0 : i32, i32
  }
  func.func @transform_4(%arg0: i32) -> (i32, i32, i32) {
    %c0_i32 = arith.constant 0 : i32
    %c0_i32_0 = arith.constant 0 : i32
    %c0_i32_1 = arith.constant 0 : i32
    return %arg0, %c0_i32, %c0_i32_0 : i32, i32, i32
  }
  func.func @transform_5(%arg0: i32) -> (i32, i32, i32) {
    %c0_i32 = arith.constant 0 : i32
    %c0_i32_0 = arith.constant 0 : i32
    %c0_i32_1 = arith.constant 0 : i32
    return %arg0, %c0_i32, %c0_i32_0 : i32, i32, i32
  }
  func.func @transform_6(%arg0: i32) -> (i32, i32, i32) {
    %c0_i32 = arith.constant 0 : i32
    %c0_i32_0 = arith.constant 0 : i32
    %c0_i32_1 = arith.constant 0 : i32
    return %arg0, %c0_i32, %c0_i32_0 : i32, i32, i32
  }
}

</mosaic_0001>

<llo_original>
// kernel: revolution_forward.2
$region0: #{revolution_forward.2}
  #allocation0 [shape = 'u32[]', space=smem, size = 0x4, offset = 0x4, fixed_abs, tag = 'smem constant byte address 0x4 - core index']
  #allocation1 [shape = 'u32[72,128]{1,0:T(1,128)}', space=vmem, size = 0x9000, scoped, tag = 'internal scratch']
  %s0 = inlined_call_operand.vmem [shape: f32[4,2,256], index: 0, kind: input, shape index: {}]
  %s1 = inlined_call_operand.vmem [shape: bf16[256,96], index: 1, kind: input, shape index: {}]
  %s2 = inlined_call_operand.vmem [shape: f32[4,2,96], index: 2, kind: output, shape index: {}]
  %s3 = sld [smem:[#allocation0]]
  $region41: #{revolution_forward.2} parent=0
    _
  %s5 = ssub.s32 1, %s3
  %s6 = scalar_select 0, %s5, %s3
  loop: start=0, step=1, limit=6
  $region2: #{revolution_forward.2} parent=0 // loop_pre_header
    _
  $region3: #{revolution_forward.2} parent=0 // loop_header
    %s8 = sphi 0, %s12
    %p9 = scmp.ge.s32.totalorder %s8, 6
    %s18 = sphi 0, %s20
    %s21 = sphi 0, %s18
    %s22 = sphi 0, %s21
    %s38 = sphi 0, %s22
    %s42 = sphi 0, %s42
    %s44 = sphi 0, %s42
    %s45 = sphi 0, %s44
    %s59 = sphi 0, %s45
    %s65 = sphi 0, %s67
    %s68 = sphi 0, %s65
    %s69 = sphi 0, %s68
    %s85 = sphi 0, %s69
  $region4: #{revolution_forward.2} parent=0 // loop_header_branch
    %11 = sbr.rel (%p9) target = $region8
  $region5: #{revolution_forward.2} parent=0 // loop_body
    %s13 = ssub.s32 %s8, 1
    %s14 = ssub.s32 %s8, 2
    %s15 = sadd.s32 %s8, 1
    %s16 = ssub.s32 %s8, %s15
    %p17 = scmp.eq.s32.totalorder %s16, 0
    %s19 = sadd.s32 %s18, 1
    %s20 = scalar_select %p17, %s18, %s19
    %p23 = pneg %p17
    %p24 = scmp.eq.s32.totalorder %s8, 3
    %p25 = por %p23, %p24
    %p26 = scmp.ne.s32.totalorder %s18, %s21
    %p27 = scmp.eq.s32.totalorder %s8, 0
    %p28 = por %p26, %p27
    %p29 = scmp.ne.s32.totalorder %s18, %s21
    %p30 = scmp.eq.s32.totalorder %s13, 3
    %p31 = por %p29, %p30
    %p32 = scmp.ne.s32.totalorder %s21, %s22
    %p33 = scmp.eq.s32.totalorder %s13, 0
    %p34 = por %p32, %p33
    %p35 = scmp.ne.s32.totalorder %s21, %s22
    %p36 = scmp.eq.s32.totalorder %s14, 3
    %p37 = por %p35, %p36
    %p39 = scmp.ne.s32.totalorder %s22, %s38
    %p40 = scmp.eq.s32.totalorder %s14, 0
    %p41 = por %p39, %p40
    %s43 = sadd.s32 %s42, 1
    %p46 = scmp.eq.s32.totalorder %s8, 3
    %p47 = scmp.ne.s32.totalorder %s42, %s44
    %p48 = scmp.eq.s32.totalorder %s8, 0
    %p49 = por %p47, %p48
    %p50 = scmp.ne.s32.totalorder %s42, %s44
    %p51 = scmp.eq.s32.totalorder %s13, 3
    %p52 = por %p50, %p51
    %p53 = scmp.ne.s32.totalorder %s44, %s45
    %p54 = scmp.eq.s32.totalorder %s13, 0
    %p55 = por %p53, %p54
    %p56 = scmp.ne.s32.totalorder %s44, %s45
    %p57 = scmp.eq.s32.totalorder %s14, 3
    %p58 = por %p56, %p57
    %p60 = scmp.ne.s32.totalorder %s45, %s59
    %p61 = scmp.eq.s32.totalorder %s14, 0
    %p62 = por %p60, %p61
    %s63 = ssub.s32 %s8, %s15
    %p64 = scmp.eq.s32.totalorder %s63, 0
    %s66 = sadd.s32 %s65, 1
    %s67 = scalar_select %p64, %s65, %s66
    %p70 = pneg %p64
    %p71 = scmp.eq.s32.totalorder %s8, 3
    %p72 = por %p70, %p71
    %p73 = scmp.ne.s32.totalorder %s65, %s68
    %p74 = scmp.eq.s32.totalorder %s8, 0
    %p75 = por %p73, %p74
    %p76 = scmp.ne.s32.totalorder %s65, %s68
    %p77 = scmp.eq.s32.totalorder %s13, 3
    %p78 = por %p76, %p77
    %p79 = scmp.ne.s32.totalorder %s68, %s69
    %p80 = scmp.eq.s32.totalorder %s13, 0
    %p81 = por %p79, %p80
    %p82 = scmp.ne.s32.totalorder %s68, %s69
    %p83 = scmp.eq.s32.totalorder %s14, 3
    %p84 = por %p82, %p83
    %p86 = scmp.ne.s32.totalorder %s69, %s85
    %p87 = scmp.eq.s32.totalorder %s14, 0
    %p88 = por %p86, %p87
    %p89 = scmp.le.s32.totalorder 1, %s8
    %p90 = scmp.lt.s32.totalorder %s8, 5
    %p91 = pnand %p89, %p90
    %p92 = pneg %p91
    // Predicated region
    $region9: #{revolution_forward.2} parent=5 // pred_check
      _
    $region10: #{revolution_forward.2} parent=5 // pred_check_branch
      %94 = sbr.rel (%p91) target = $region12
    $region11: #{revolution_forward.2} parent=5 // pred_region
      %s95 = ssub.s32 %s8, 1
      // Predicated region
      $region13: #{revolution_forward.2} parent=11 // pred_check
        %p96 = pneg %p55
      $region14: #{revolution_forward.2} parent=11 // pred_check_branch
        %98 = sbr.rel (%p96) target = $region16
      $region15: #{revolution_forward.2} parent=11 // pred_region
        _
      $region16: #{revolution_forward.2} parent=11 // pred_fallthru
        _
    $region12: #{revolution_forward.2} parent=5 // pred_fallthru
      _
    %p99 = scmp.lt.s32.totalorder %s8, 4
    // Predicated region
    $region17: #{revolution_forward.2} parent=5 // pred_check
      %p100 = pneg %p99
    $region18: #{revolution_forward.2} parent=5 // pred_check_branch
      %102 = sbr.rel (%p100) target = $region20
    $region19: #{revolution_forward.2} parent=5 // pred_region
      // Predicated region
      $region21: #{revolution_forward.2} parent=19 // pred_check
        %p103 = pneg %p28
      $region22: #{revolution_forward.2} parent=19 // pred_check_branch
        %105 = sbr.rel (%p103) target = $region24
      $region23: #{revolution_forward.2} parent=19 // pred_region
        %p106 = scmp.lt.s32.totalorder %s8, 3
        %s107 = scalar_select %p106, %s8, 3
        %s108 = smul.addr %s107, 2
        %s109 = smul.addr %s108, 2
        %s110 = scalar_lea.vmem %s0, %s109
      $region24: #{revolution_forward.2} parent=19 // pred_fallthru
        _
    $region20: #{revolution_forward.2} parent=5 // pred_fallthru
      _
    %p111 = scmp.le.s32.totalorder 1, %s8
    %p112 = scmp.lt.s32.totalorder %s8, 5
    %p113 = pnand %p111, %p112
    %p114 = pneg %p113
    // Predicated region
    $region25: #{revolution_forward.2} parent=5 // pred_check
      _
    $region26: #{revolution_forward.2} parent=5 // pred_check_branch
      %116 = sbr.rel (%p113) target = $region28
    $region27: #{revolution_forward.2} parent=5 // pred_region
      %s117 = ssub.s32 %s8, 1
      %p118 = scmp.lt.s32.totalorder %s13, 3
      %s119 = scalar_select %p118, %s13, 3
      %s120 = smul.addr %s119, 2
      %s121 = smul.addr %s120, 2
      %s122 = scalar_lea.vmem %s0, %s121
      %p123 = pneg %p34
      %p124 = pneg %p31
      %p125 = pneg %p55
      %p126 = pneg %p52
      %p127 = pneg %p81
      %p128 = pneg %p78
      %p129 = scmp.lt.s32.totalorder %s13, 3
      %s130 = scalar_select %p129, %s13, 3
      %s131 = smul.addr %s130, 2
      %s132 = scalar_lea.vmem %s2, %s131
      %p133 = scmp.lt.s32.totalorder %s13, 3
      %s134 = scalar_select %p133, %s13, 3
      %s135 = smul.addr %s134, 2
      %s136 = smul.addr %s135, 2
      %s137 = scalar_lea.vmem %s0, %s136
      %p138 = scmp.lt.s32.totalorder %s13, 3
      %s139 = scalar_select %p138, %s13, 3
      %s140 = smul.addr %s139, 2
      %s141 = scalar_lea.vmem %s2, %s140
      %v142 = vld [vmem:[%s137] sm:$0xf]
      %144 = vst [vmem:[#allocation1] ss:$4 sm:$0xff] %v142
      %v145 = vld.sshfl [vmem:[#allocation1] sm:$0xff pattern:$0x73625140]
      %v146 = vld.sshfl [vmem:[#allocation1 + $0x8] sm:$0xff pattern:$0x73625140]
      %v149 = vpack.c.bf16 %v145, %v145
      %v150 = vpack.c.bf16 %v146, %v146
      %v151 = vld [vmem:[%s1] sm:$0xf]
      %v152 = vld [vmem:[%s1 + $0x4] sm:$0xf]
      %v153 = vld [vmem:[%s1 + $0x8] sm:$0xf]
      %v154 = vld [vmem:[%s1 + $0xc] sm:$0xf]
      %v155 = vld [vmem:[%s1 + $0x10] sm:$0xf]
      %v156 = vld [vmem:[%s1 + $0x14] sm:$0xf]
      %v157 = vld [vmem:[%s1 + $0x18] sm:$0xf]
      %v158 = vld [vmem:[%s1 + $0x1c] sm:$0xf]
      %v159 = vld [vmem:[%s1 + $0x20] sm:$0xf]
      %v160 = vld [vmem:[%s1 + $0x24] sm:$0xf]
      %v161 = vld [vmem:[%s1 + $0x28] sm:$0xf]
      %v162 = vld [vmem:[%s1 + $0x2c] sm:$0xf]
      %v163 = vld [vmem:[%s1 + $0x30] sm:$0xf]
      %v164 = vld [vmem:[%s1 + $0x34] sm:$0xf]
      %v165 = vld [vmem:[%s1 + $0x38] sm:$0xf]
      %v166 = vld [vmem:[%s1 + $0x3c] sm:$0xf]
      %v167 = vld [vmem:[%s1 + $0x40] sm:$0xf]
      %v168 = vld [vmem:[%s1 + $0x44] sm:$0xf]
      %v169 = vld [vmem:[%s1 + $0x48] sm:$0xf]
      %v170 = vld [vmem:[%s1 + $0x4c] sm:$0xf]
      %v171 = vld [vmem:[%s1 + $0x50] sm:$0xf]
      %v172 = vld [vmem:[%s1 + $0x54] sm:$0xf]
      %v173 = vld [vmem:[%s1 + $0x58] sm:$0xf]
      %v174 = vld [vmem:[%s1 + $0x5c] sm:$0xf]
      %v175 = vld [vmem:[%s1 + $0x60] sm:$0xf]
      %v176 = vld [vmem:[%s1 + $0x64] sm:$0xf]
      %v177 = vld [vmem:[%s1 + $0x68] sm:$0xf]
      %v178 = vld [vmem:[%s1 + $0x6c] sm:$0xf]
      %v179 = vld [vmem:[%s1 + $0x70] sm:$0xf]
      %v180 = vld [vmem:[%s1 + $0x74] sm:$0xf]
      %v181 = vld [vmem:[%s1 + $0x78] sm:$0xf]
      %v182 = vld [vmem:[%s1 + $0x7c] sm:$0xf]
      %v215 = vunpack.c.l.b16 %v151
      %v216 = vunpack.c.l.b16 %v152
      %v217 = vunpack.c.l.b16 %v153
      %v218 = vunpack.c.l.b16 %v154
      %v219 = vunpack.c.l.b16 %v155
      %v220 = vunpack.c.l.b16 %v156
      %v221 = vunpack.c.l.b16 %v157
      %v222 = vunpack.c.l.b16 %v158
      %v223 = vunpack.c.l.b16 %v159
      %v224 = vunpack.c.l.b16 %v160
      %v225 = vunpack.c.l.b16 %v161
      %v226 = vunpack.c.l.b16 %v162
      %v227 = vunpack.c.l.b16 %v163
      %v228 = vunpack.c.l.b16 %v164
      %v229 = vunpack.c.l.b16 %v165
      %v230 = vunpack.c.l.b16 %v166
      %v231 = vunpack.c.l.b16 %v167
      %v232 = vunpack.c.l.b16 %v168
      %v233 = vunpack.c.l.b16 %v169
      %v234 = vunpack.c.l.b16 %v170
      %v235 = vunpack.c.l.b16 %v171
      %v236 = vunpack.c.l.b16 %v172
      %v237 = vunpack.c.l.b16 %v173
      %v238 = vunpack.c.l.b16 %v174
      %v239 = vunpack.c.l.b16 %v175
      %v240 = vunpack.c.l.b16 %v176
      %v241 = vunpack.c.l.b16 %v177
      %v242 = vunpack.c.l.b16 %v178
      %v243 = vunpack.c.l.b16 %v179
      %v244 = vunpack.c.l.b16 %v180
      %v245 = vunpack.c.l.b16 %v181
      %v246 = vunpack.c.l.b16 %v182
      %v247 = vpack.c.b16 %v216, %v215
      %v248 = vpack.c.b16 %v218, %v217
      %v249 = vpack.c.b16 %v220, %v219
      %v250 = vpack.c.b16 %v222, %v221
      %v251 = vpack.c.b16 %v224, %v223
      %v252 = vpack.c.b16 %v226, %v225
      %v253 = vpack.c.b16 %v228, %v227
      %v254 = vpack.c.b16 %v230, %v229
      %v255 = vpack.c.b16 %v232, %v231
      %v256 = vpack.c.b16 %v234, %v233
      %v257 = vpack.c.b16 %v236, %v235
      %v258 = vpack.c.b16 %v238, %v237
      %v259 = vpack.c.b16 %v240, %v239
      %v260 = vpack.c.b16 %v242, %v241
      %v261 = vpack.c.b16 %v244, %v243
      %v262 = vpack.c.b16 %v246, %v245
      %279 = vmatpush.bf16.msra.mxu0 %v254
      %280 = vmatpush.bf16.msra.mxu0 %v253
      %281 = vmatpush.bf16.msra.mxu0 %v252
      %282 = vmatpush.bf16.msra.mxu0 %v251
      %283 = vmatpush.bf16.msra.mxu0 %v250
      %284 = vmatpush.bf16.msra.mxu0 %v249
      %285 = vmatpush.bf16.msra.mxu0 %v248
      %286 = vmatpush.bf16.msra.mxu0 %v247
      %287 = vmatmul.bf16.gmra.mxu0 %v149
      %v288 = vpop.f32.mrf.mxu0
      %v289 = vadd.f32 0.0, %v288
      %v290 = vpop.f32.mrf.mxu0
      %291 = vdwg.mxu0
      %292 = vmatpush.bf16.msra.mxu0 %v262
      %293 = vmatpush.bf16.msra.mxu0 %v261
      %294 = vmatpush.bf16.msra.mxu0 %v260
      %295 = vmatpush.bf16.msra.mxu0 %v259
      %296 = vmatpush.bf16.msra.mxu0 %v258
      %297 = vmatpush.bf16.msra.mxu0 %v257
      %298 = vmatpush.bf16.msra.mxu0 %v256
      %299 = vmatpush.bf16.msra.mxu0 %v255
      %300 = vmatmul.bf16.gmra.mxu0 %v150
      %v301 = vpop.f32.mrf.mxu0
      %v302 = vadd.f32 %v289, %v301
      %v303 = vpop.f32.mrf.mxu0
      %304 = vdwg.mxu0
      %vm305 = vcmask 779264
      %306 = vst.msk [vmem:[%s141] sm:$0x3] %vm305, %v302
      %p307 = scmp.lt.s32.totalorder %s13, 3
      %s308 = scalar_select %p307, %s13, 3
      %s309 = smul.addr %s308, 2
      %s310 = scalar_lea.vmem %s2, %s309
      // Predicated region
      $region29: #{revolution_forward.2} parent=27 // pred_check
        %p311 = pneg %p78
      $region30: #{revolution_forward.2} parent=27 // pred_check_branch
        %313 = sbr.rel (%p311) target = $region32
      $region31: #{revolution_forward.2} parent=27 // pred_region
        _
      $region32: #{revolution_forward.2} parent=27 // pred_fallthru
        _
    $region28: #{revolution_forward.2} parent=5 // pred_fallthru
      _
    %p314 = scmp.le.s32.totalorder 2, %s8
    // Predicated region
    $region33: #{revolution_forward.2} parent=5 // pred_check
      %p315 = pneg %p314
    $region34: #{revolution_forward.2} parent=5 // pred_check_branch
      %317 = sbr.rel (%p315) target = $region36
    $region35: #{revolution_forward.2} parent=5 // pred_region
      %s318 = ssub.s32 %s8, 2
      // Predicated region
      $region37: #{revolution_forward.2} parent=35 // pred_check
        %p319 = pneg %p84
      $region38: #{revolution_forward.2} parent=35 // pred_check_branch
        %321 = sbr.rel (%p319) target = $region40
      $region39: #{revolution_forward.2} parent=35 // pred_region
        %p322 = scmp.lt.s32.totalorder %s14, 3
        %s323 = scalar_select %p322, %s14, 3
        %s324 = smul.addr %s323, 2
        %s325 = scalar_lea.vmem %s2, %s324
      $region40: #{revolution_forward.2} parent=35 // pred_fallthru
        _
    $region36: #{revolution_forward.2} parent=5 // pred_fallthru
      _
  $region6: #{revolution_forward.2} parent=0 // loop_footer
    %s12 = sadd.s32 1, %s8
  $region7: #{revolution_forward.2} parent=0 // loop_footer_branch
    %7 = sbr.rel target = $region3
  $region8: #{revolution_forward.2} parent=0 // loop_exit
    _

// kernel: revolution_forward.3
$region0: #{revolution_forward.3}
  #allocation0 [shape = 'u32[]', space=smem, size = 0x4, offset = 0x4, fixed_abs, tag = 'smem constant byte address 0x4 - core index']
  #allocation1 [shape = 'u32[72,128]{1,0:T(1,128)}', space=vmem, size = 0x9000, scoped, tag = 'internal scratch']
  %s0 = inlined_call_operand.vmem [shape: f32[4,2,256], index: 0, kind: input, shape index: {}]
  %s1 = inlined_call_operand.hbm [shape: bf16[256,1024], index: 1, kind: input, shape index: {}]
  %s2 = inlined_call_operand.vmem [shape: bf16[32,1024], index: 2, kind: input, shape index: {}]
  %s3 = inlined_call_operand.vmem [shape: bf16[32,1024], index: 3, kind: input, shape index: {}]
  %s4 = inlined_call_operand.vmem [shape: f32[4,2,32], index: 4, kind: input, shape index: {}]
  %s5 = inlined_call_operand.vmem [shape: f32[4,2,32], index: 5, kind: input, shape index: {}]
  %s6 = inlined_call_operand.vmem [shape: f32[4,2,1024], index: 6, kind: output, shape index: {}]
  %s7 = sld [smem:[#allocation0]]
  $region61: #{revolution_forward.3} parent=0
    _
  %s9 = ssub.s32 1, %s7
  %s10 = scalar_select 0, %s9, %s7
  $region1: #{revolution_forward.3} parent=0
    #allocation2 [shape = 'u8[524288]{0}', space=vmem, size = 0x80000, scoped, tag = 'input window, operand 1, single buffered']
    #allocation3 [shape = 's32[2]{0}', space=sflag, size = 0x8, scoped, tag = 'scoped memory for revolution_forward.3']
    %11 = vsyncpa [#allocation3], 0
    loop: start=0, step=1, limit=6
    $region2: #{revolution_forward.3} parent=1 // loop_pre_header
      _
    $region3: #{revolution_forward.3} parent=1 // loop_header
      %s13 = sphi 0, %s17
      %p14 = scmp.ge.s32.totalorder %s13, 6
      %s23 = sphi 0, %s25
      %s26 = sphi 0, %s23
      %s27 = sphi 0, %s26
      %s43 = sphi 0, %s27
      %s47 = sphi 0, %s47
      %s49 = sphi 0, %s47
      %s50 = sphi 0, %s49
      %s64 = sphi 0, %s50
      %s68 = sphi 0, %s68
      %s70 = sphi 0, %s68
      %s71 = sphi 0, %s70
      %s85 = sphi 0, %s71
      %s89 = sphi 0, %s89
      %s91 = sphi 0, %s89
      %s92 = sphi 0, %s91
      %s106 = sphi 0, %s92
      %s112 = sphi 0, %s114
      %s115 = sphi 0, %s112
      %s116 = sphi 0, %s115
      %s132 = sphi 0, %s116
      %s138 = sphi 0, %s140
      %s141 = sphi 0, %s138
      %s142 = sphi 0, %s141
      %s158 = sphi 0, %s142
      %s164 = sphi 0, %s166
      %s167 = sphi 0, %s164
      %s168 = sphi 0, %s167
      %s184 = sphi 0, %s168
    $region4: #{revolution_forward.3} parent=1 // loop_header_branch
      %16 = sbr.rel (%p14) target = $region8
    $region5: #{revolution_forward.3} parent=1 // loop_body
      %s18 = ssub.s32 %s13, 1
      %s19 = ssub.s32 %s13, 2
      %s20 = sadd.s32 %s13, 1
      %s21 = ssub.s32 %s13, %s20
      %p22 = scmp.eq.s32.totalorder %s21, 0
      %s24 = sadd.s32 %s23, 1
      %s25 = scalar_select %p22, %s23, %s24
      %p28 = pneg %p22
      %p29 = scmp.eq.s32.totalorder %s13, 3
      %p30 = por %p28, %p29
      %p31 = scmp.ne.s32.totalorder %s23, %s26
      %p32 = scmp.eq.s32.totalorder %s13, 0
      %p33 = por %p31, %p32
      %p34 = scmp.ne.s32.totalorder %s23, %s26
      %p35 = scmp.eq.s32.totalorder %s18, 3
      %p36 = por %p34, %p35
      %p37 = scmp.ne.s32.totalorder %s26, %s27
      %p38 = scmp.eq.s32.totalorder %s18, 0
      %p39 = por %p37, %p38
      %p40 = scmp.ne.s32.totalorder %s26, %s27
      %p41 = scmp.eq.s32.totalorder %s19, 3
      %p42 = por %p40, %p41
      %p44 = scmp.ne.s32.totalorder %s27, %s43
      %p45 = scmp.eq.s32.totalorder %s19, 0
      %p46 = por %p44, %p45
      %s48 = sadd.s32 %s47, 1
      %p51 = scmp.eq.s32.totalorder %s13, 3
      %p52 = scmp.ne.s32.totalorder %s47, %s49
      %p53 = scmp.eq.s32.totalorder %s13, 0
      %p54 = por %p52, %p53
      %p55 = scmp.ne.s32.totalorder %s47, %s49
      %p56 = scmp.eq.s32.totalorder %s18, 3
      %p57 = por %p55, %p56
      %p58 = scmp.ne.s32.totalorder %s49, %s50
      %p59 = scmp.eq.s32.totalorder %s18, 0
      %p60 = por %p58, %p59
      %p61 = scmp.ne.s32.totalorder %s49, %s50
      %p62 = scmp.eq.s32.totalorder %s19, 3
      %p63 = por %p61, %p62
      %p65 = scmp.ne.s32.totalorder %s50, %s64
      %p66 = scmp.eq.s32.totalorder %s19, 0
      %p67 = por %p65, %p66
      %s69 = sadd.s32 %s68, 1
      %p72 = scmp.eq.s32.totalorder %s13, 3
      %p73 = scmp.ne.s32.totalorder %s68, %s70
      %p74 = scmp.eq.s32.totalorder %s13, 0
      %p75 = por %p73, %p74
      %p76 = scmp.ne.s32.totalorder %s68, %s70
      %p77 = scmp.eq.s32.totalorder %s18, 3
      %p78 = por %p76, %p77
      %p79 = scmp.ne.s32.totalorder %s70, %s71
      %p80 = scmp.eq.s32.totalorder %s18, 0
      %p81 = por %p79, %p80
      %p82 = scmp.ne.s32.totalorder %s70, %s71
      %p83 = scmp.eq.s32.totalorder %s19, 3
      %p84 = por %p82, %p83
      %p86 = scmp.ne.s32.totalorder %s71, %s85
      %p87 = scmp.eq.s32.totalorder %s19, 0
      %p88 = por %p86, %p87
      %s90 = sadd.s32 %s89, 1
      %p93 = scmp.eq.s32.totalorder %s13, 3
      %p94 = scmp.ne.s32.totalorder %s89, %s91
      %p95 = scmp.eq.s32.totalorder %s13, 0
      %p96 = por %p94, %p95
      %p97 = scmp.ne.s32.totalorder %s89, %s91
      %p98 = scmp.eq.s32.totalorder %s18, 3
      %p99 = por %p97, %p98
      %p100 = scmp.ne.s32.totalorder %s91, %s92
      %p101 = scmp.eq.s32.totalorder %s18, 0
      %p102 = por %p100, %p101
      %p103 = scmp.ne.s32.totalorder %s91, %s92
      %p104 = scmp.eq.s32.totalorder %s19, 3
      %p105 = por %p103, %p104
      %p107 = scmp.ne.s32.totalorder %s92, %s106
      %p108 = scmp.eq.s32.totalorder %s19, 0
      %p109 = por %p107, %p108
      %s110 = ssub.s32 %s13, %s20
      %p111 = scmp.eq.s32.totalorder %s110, 0
      %s113 = sadd.s32 %s112, 1
      %s114 = scalar_select %p111, %s112, %s113
      %p117 = pneg %p111
      %p118 = scmp.eq.s32.totalorder %s13, 3
      %p119 = por %p117, %p118
      %p120 = scmp.ne.s32.totalorder %s112, %s115
      %p121 = scmp.eq.s32.totalorder %s13, 0
      %p122 = por %p120, %p121
      %p123 = scmp.ne.s32.totalorder %s112, %s115
      %p124 = scmp.eq.s32.totalorder %s18, 3
      %p125 = por %p123, %p124
      %p126 = scmp.ne.s32.totalorder %s115, %s116
      %p127 = scmp.eq.s32.totalorder %s18, 0
      %p128 = por %p126, %p127
      %p129 = scmp.ne.s32.totalorder %s115, %s116
      %p130 = scmp.eq.s32.totalorder %s19, 3
      %p131 = por %p129, %p130
      %p133 = scmp.ne.s32.totalorder %s116, %s132
      %p134 = scmp.eq.s32.totalorder %s19, 0
      %p135 = por %p133, %p134
      %s136 = ssub.s32 %s13, %s20
      %p137 = scmp.eq.s32.totalorder %s136, 0
      %s139 = sadd.s32 %s138, 1
      %s140 = scalar_select %p137, %s138, %s139
      %p143 = pneg %p137
      %p144 = scmp.eq.s32.totalorder %s13, 3
      %p145 = por %p143, %p144
      %p146 = scmp.ne.s32.totalorder %s138, %s141
      %p147 = scmp.eq.s32.totalorder %s13, 0
      %p148 = por %p146, %p147
      %p149 = scmp.ne.s32.totalorder %s138, %s141
      %p150 = scmp.eq.s32.totalorder %s18, 3
      %p151 = por %p149, %p150
      %p152 = scmp.ne.s32.totalorder %s141, %s142
      %p153 = scmp.eq.s32.totalorder %s18, 0
      %p154 = por %p152, %p153
      %p155 = scmp.ne.s32.totalorder %s141, %s142
      %p156 = scmp.eq.s32.totalorder %s19, 3
      %p157 = por %p155, %p156
      %p159 = scmp.ne.s32.totalorder %s142, %s158
      %p160 = scmp.eq.s32.totalorder %s19, 0
      %p161 = por %p159, %p160
      %s162 = ssub.s32 %s13, %s20
      %p163 = scmp.eq.s32.totalorder %s162, 0
      %s165 = sadd.s32 %s164, 1
      %s166 = scalar_select %p163, %s164, %s165
      %p169 = pneg %p163
      %p170 = scmp.eq.s32.totalorder %s13, 3
      %p171 = por %p169, %p170
      %p172 = scmp.ne.s32.totalorder %s164, %s167
      %p173 = scmp.eq.s32.totalorder %s13, 0
      %p174 = por %p172, %p173
      %p175 = scmp.ne.s32.totalorder %s164, %s167
      %p176 = scmp.eq.s32.totalorder %s18, 3
      %p177 = por %p175, %p176
      %p178 = scmp.ne.s32.totalorder %s167, %s168
      %p179 = scmp.eq.s32.totalorder %s18, 0
      %p180 = por %p178, %p179
      %p181 = scmp.ne.s32.totalorder %s167, %s168
      %p182 = scmp.eq.s32.totalorder %s19, 3
      %p183 = por %p181, %p182
      %p185 = scmp.ne.s32.totalorder %s168, %s184
      %p186 = scmp.eq.s32.totalorder %s19, 0
      %p187 = por %p185, %p186
      %p188 = scmp.le.s32.totalorder 1, %s13
      %p189 = scmp.lt.s32.totalorder %s13, 5
      %p190 = pnand %p188, %p189
      %p191 = pneg %p190
      // Predicated region
      $region9: #{revolution_forward.3} parent=5 // pred_check
        _
      $region10: #{revolution_forward.3} parent=5 // pred_check_branch
        %193 = sbr.rel (%p190) target = $region12
      $region11: #{revolution_forward.3} parent=5 // pred_region
        %s194 = ssub.s32 %s13, 1
        // Predicated region
        $region13: #{revolution_forward.3} parent=11 // pred_check
          %p195 = pneg %p60
        $region14: #{revolution_forward.3} parent=11 // pred_check_branch
          %197 = sbr.rel (%p195) target = $region16
        $region15: #{revolution_forward.3} parent=11 // pred_region
          %199 = vsyncadd [#allocation3], 0
          %s200 = sshll.u32 %s1, 4
          %s201 = int_to_ptr.hbm [resolvable:$true] %s200
          %s202 = sshll.u32 [#allocation2], 4
          %s203 = int_to_ptr.vmem [resolvable:$true] %s202
          %208 = dma.hbm_to_vmem [thread:$0]  %s201, 16384, %s203, [#allocation3], 512, 512, 32
        $region16: #{revolution_forward.3} parent=11 // pred_fallthru
          _
        // Predicated region
        $region17: #{revolution_forward.3} parent=11 // pred_check
          %p209 = pneg %p81
        $region18: #{revolution_forward.3} parent=11 // pred_check_branch
          %211 = sbr.rel (%p209) target = $region20
        $region19: #{revolution_forward.3} parent=11 // pred_region
          _
        $region20: #{revolution_forward.3} parent=11 // pred_fallthru
          _
        // Predicated region
        $region21: #{revolution_forward.3} parent=11 // pred_check
          %p212 = pneg %p102
        $region22: #{revolution_forward.3} parent=11 // pred_check_branch
          %214 = sbr.rel (%p212) target = $region24
        $region23: #{revolution_forward.3} parent=11 // pred_region
          _
        $region24: #{revolution_forward.3} parent=11 // pred_fallthru
          _
      $region12: #{revolution_forward.3} parent=5 // pred_fallthru
        _
      %p215 = scmp.lt.s32.totalorder %s13, 4
      // Predicated region
      $region25: #{revolution_forward.3} parent=5 // pred_check
        %p216 = pneg %p215
      $region26: #{revolution_forward.3} parent=5 // pred_check_branch
        %218 = sbr.rel (%p216) target = $region28
      $region27: #{revolution_forward.3} parent=5 // pred_region
        // Predicated region
        $region29: #{revolution_forward.3} parent=27 // pred_check
          %p219 = pneg %p33
        $region30: #{revolution_forward.3} parent=27 // pred_check_branch
          %221 = sbr.rel (%p219) target = $region32
        $region31: #{revolution_forward.3} parent=27 // pred_region
          %p222 = scmp.lt.s32.totalorder %s13, 3
          %s223 = scalar_select %p222, %s13, 3
          %s224 = smul.addr %s223, 2
          %s225 = smul.addr %s224, 2
          %s226 = scalar_lea.vmem %s0, %s225
        $region32: #{revolution_forward.3} parent=27 // pred_fallthru
          _
        // Predicated region
        $region33: #{revolution_forward.3} parent=27 // pred_check
          %p227 = pneg %p122
        $region34: #{revolution_forward.3} parent=27 // pred_check_branch
          %229 = sbr.rel (%p227) target = $region36
        $region35: #{revolution_forward.3} parent=27 // pred_region
          %p230 = scmp.lt.s32.totalorder %s13, 3
          %s231 = scalar_select %p230, %s13, 3
          %s232 = smul.addr %s231, 2
          %s233 = scalar_lea.vmem %s4, %s232
        $region36: #{revolution_forward.3} parent=27 // pred_fallthru
          _
        // Predicated region
        $region37: #{revolution_forward.3} parent=27 // pred_check
          %p234 = pneg %p148
        $region38: #{revolution_forward.3} parent=27 // pred_check_branch
          %236 = sbr.rel (%p234) target = $region40
        $region39: #{revolution_forward.3} parent=27 // pred_region
          %p237 = scmp.lt.s32.totalorder %s13, 3
          %s238 = scalar_select %p237, %s13, 3
          %s239 = smul.addr %s238, 2
          %s240 = scalar_lea.vmem %s5, %s239
        $region40: #{revolution_forward.3} parent=27 // pred_fallthru
          _
      $region28: #{revolution_forward.3} parent=5 // pred_fallthru
        _
      %p241 = scmp.le.s32.totalorder 1, %s13
      %p242 = scmp.lt.s32.totalorder %s13, 5
      %p243 = pnand %p241, %p242
      %p244 = pneg %p243
      // Predicated region
      $region41: #{revolution_forward.3} parent=5 // pred_check
        _
      $region42: #{revolution_forward.3} parent=5 // pred_check_branch
        %246 = sbr.rel (%p243) target = $region44
      $region43: #{revolution_forward.3} parent=5 // pred_region
        %s247 = ssub.s32 %s13, 1
        // Predicated region
        $region45: #{revolution_forward.3} parent=43 // pred_check
          %p248 = pneg %p60
        $region46: #{revolution_forward.3} parent=43 // pred_check_branch
          %250 = sbr.rel (%p248) target = $region48
        $region47: #{revolution_forward.3} parent=43 // pred_region
          %252 = dma.done [#allocation3], 16384
        $region48: #{revolution_forward.3} parent=43 // pred_fallthru
          _
        %p253 = scmp.lt.s32.totalorder %s18, 3
        %s254 = scalar_select %p253, %s18, 3
        %s255 = smul.addr %s254, 2
        %s256 = smul.addr %s255, 2
        %s257 = scalar_lea.vmem %s0, %s256
        %p258 = pneg %p39
        %p259 = pneg %p36
        %p260 = pneg %p60
        %p261 = pneg %p57
        %p262 = pneg %p81
        %p263 = pneg %p78
        %p264 = pneg %p102
        %p265 = pneg %p99
        %p266 = scmp.lt.s32.totalorder %s18, 3
        %s267 = scalar_select %p266, %s18, 3
        %s268 = smul.addr %s267, 2
        %s269 = scalar_lea.vmem %s4, %s268
        %p270 = pneg %p128
        %p271 = pneg %p125
        %p272 = scmp.lt.s32.totalorder %s18, 3
        %s273 = scalar_select %p272, %s18, 3
        %s274 = smul.addr %s273, 2
        %s275 = scalar_lea.vmem %s5, %s274
        %p276 = pneg %p154
        %p277 = pneg %p151
        %p278 = pneg %p180
        %p279 = pneg %p177
        %p280 = scmp.lt.s32.totalorder %s18, 3
        %s281 = scalar_select %p280, %s18, 3
        %s282 = smul.addr %s281, 8
        %s283 = smul.addr %s282, 2
        %s284 = scalar_lea.vmem %s6, %s283
        %p285 = scmp.lt.s32.totalorder %s18, 3
        %s286 = scalar_select %p285, %s18, 3
        %s287 = smul.addr %s286, 2
        %s288 = smul.addr %s287, 2
        %s289 = scalar_lea.vmem %s0, %s288
        %p290 = scmp.lt.s32.totalorder %s18, 3
        %s291 = scalar_select %p290, %s18, 3
        %s292 = smul.addr %s291, 2
        %s293 = scalar_lea.vmem %s4, %s292
        %p294 = scmp.lt.s32.totalorder %s18, 3
        %s295 = scalar_select %p294, %s18, 3
        %s296 = smul.addr %s295, 2
        %s297 = scalar_lea.vmem %s5, %s296
        %p298 = scmp.lt.s32.totalorder %s18, 3
        %s299 = scalar_select %p298, %s18, 3
        %s300 = smul.addr %s299, 8
        %s301 = smul.addr %s300, 2
        %s302 = scalar_lea.vmem %s6, %s301
        %v304 = vld [vmem:[%s289] sm:$0xf]
        %306 = vst [vmem:[#allocation1] ss:$4 sm:$0xff] %v304
        %v307 = vld.sshfl [vmem:[#allocation1] sm:$0xff pattern:$0x73625140]
        %v308 = vld.sshfl [vmem:[#allocation1 + $0x8] sm:$0xff pattern:$0x73625140]
        %v311 = vpack.c.bf16 %v307, %v307
        %v312 = vpack.c.bf16 %v308, %v308
        %v313 = vld [vmem:[#allocation2] sm:$0xff]
        %v314 = vld [vmem:[#allocation2 + $0x8] sm:$0xff]
        %v315 = vld [vmem:[#allocation2 + $0x10] sm:$0xff]
        %v316 = vld [vmem:[#allocation2 + $0x18] sm:$0xff]
        %v317 = vld [vmem:[#allocation2 + $0x20] sm:$0xff]
        %v318 = vld [vmem:[#allocation2 + $0x28] sm:$0xff]
        %v319 = vld [vmem:[#allocation2 + $0x30] sm:$0xff]
        %v320 = vld [vmem:[#allocation2 + $0x38] sm:$0xff]
        %v321 = vld [vmem:[#allocation2 + $0x40] sm:$0xff]
        %v322 = vld [vmem:[#allocation2 + $0x48] sm:$0xff]
        %v323 = vld [vmem:[#allocation2 + $0x50] sm:$0xff]
        %v324 = vld [vmem:[#allocation2 + $0x58] sm:$0xff]
        %v325 = vld [vmem:[#allocation2 + $0x60] sm:$0xff]
        %v326 = vld [vmem:[#allocation2 + $0x68] sm:$0xff]
        %v327 = vld [vmem:[#allocation2 + $0x70] sm:$0xff]
        %v328 = vld [vmem:[#allocation2 + $0x78] sm:$0xff]
        %v329 = vld [vmem:[#allocation2 + $0x80] sm:$0xff]
        %v330 = vld [vmem:[#allocation2 + $0x88] sm:$0xff]
        %v331 = vld [vmem:[#allocation2 + $0x90] sm:$0xff]
        %v332 = vld [vmem:[#allocation2 + $0x98] sm:$0xff]
        %v333 = vld [vmem:[#allocation2 + $0xa0] sm:$0xff]
        %v334 = vld [vmem:[#allocation2 + $0xa8] sm:$0xff]
        %v335 = vld [vmem:[#allocation2 + $0xb0] sm:$0xff]
        %v336 = vld [vmem:[#allocation2 + $0xb8] sm:$0xff]
        %v337 = vld [vmem:[#allocation2 + $0xc0] sm:$0xff]
        %v338 = vld [vmem:[#allocation2 + $0xc8] sm:$0xff]
        %v339 = vld [vmem:[#allocation2 + $0xd0] sm:$0xff]
        %v340 = vld [vmem:[#allocation2 + $0xd8] sm:$0xff]
        %v341 = vld [vmem:[#allocation2 + $0xe0] sm:$0xff]
        %v342 = vld [vmem:[#allocation2 + $0xe8] sm:$0xff]
        %v343 = vld [vmem:[#allocation2 + $0xf0] sm:$0xff]
        %v344 = vld [vmem:[#allocation2 + $0xf8] sm:$0xff]
        %v345 = vld [vmem:[#allocation2 + $0x100] sm:$0xff]
        %v346 = vld [vmem:[#allocation2 + $0x108] sm:$0xff]
        %v347 = vld [vmem:[#allocation2 + $0x110] sm:$0xff]
        %v348 = vld [vmem:[#allocation2 + $0x118] sm:$0xff]
        %v349 = vld [vmem:[#allocation2 + $0x120] sm:$0xff]
        %v350 = vld [vmem:[#allocation2 + $0x128] sm:$0xff]
        %v351 = vld [vmem:[#allocation2 + $0x130] sm:$0xff]
        %v352 = vld [vmem:[#allocation2 + $0x138] sm:$0xff]
        %v353 = vld [vmem:[#allocation2 + $0x140] sm:$0xff]
        %v354 = vld [vmem:[#allocation2 + $0x148] sm:$0xff]
        %v355 = vld [vmem:[#allocation2 + $0x150] sm:$0xff]
        %v356 = vld [vmem:[#allocation2 + $0x158] sm:$0xff]
        %v357 = vld [vmem:[#allocation2 + $0x160] sm:$0xff]
        %v358 = vld [vmem:[#allocation2 + $0x168] sm:$0xff]
        %v359 = vld [vmem:[#allocation2 + $0x170] sm:$0xff]
        %v360 = vld [vmem:[#allocation2 + $0x178] sm:$0xff]
        %v361 = vld [vmem:[#allocation2 + $0x180] sm:$0xff]
        %v362 = vld [vmem:[#allocation2 + $0x188] sm:$0xff]
        %v363 = vld [vmem:[#allocation2 + $0x190] sm:$0xff]
        %v364 = vld [vmem:[#allocation2 + $0x198] sm:$0xff]
        %v365 = vld [vmem:[#allocation2 + $0x1a0] sm:$0xff]
        %v366 = vld [vmem:[#allocation2 + $0x1a8] sm:$0xff]
        %v367 = vld [vmem:[#allocation2 + $0x1b0] sm:$0xff]
        %v368 = vld [vmem:[#allocation2 + $0x1b8] sm:$0xff]
        %v369 = vld [vmem:[#allocation2 + $0x1c0] sm:$0xff]
        %v370 = vld [vmem:[#allocation2 + $0x1c8] sm:$0xff]
        %v371 = vld [vmem:[#allocation2 + $0x1d0] sm:$0xff]
        %v372 = vld [vmem:[#allocation2 + $0x1d8] sm:$0xff]
        %v373 = vld [vmem:[#allocation2 + $0x1e0] sm:$0xff]
        %v374 = vld [vmem:[#allocation2 + $0x1e8] sm:$0xff]
        %v375 = vld [vmem:[#allocation2 + $0x1f0] sm:$0xff]
        %v376 = vld [vmem:[#allocation2 + $0x1f8] sm:$0xff]
        %v377 = vld [vmem:[#allocation2 + $0x200] sm:$0xff]
        %v378 = vld [vmem:[#allocation2 + $0x208] sm:$0xff]
        %v379 = vld [vmem:[#allocation2 + $0x210] sm:$0xff]
        %v380 = vld [vmem:[#allocation2 + $0x218] sm:$0xff]
        %v381 = vld [vmem:[#allocation2 + $0x220] sm:$0xff]
        %v382 = vld [vmem:[#allocation2 + $0x228] sm:$0xff]
        %v383 = vld [vmem:[#allocation2 + $0x230] sm:$0xff]
        %v384 = vld [vmem:[#allocation2 + $0x238] sm:$0xff]
        %v385 = vld [vmem:[#allocation2 + $0x240] sm:$0xff]
        %v386 = vld [vmem:[#allocation2 + $0x248] sm:$0xff]
        %v387 = vld [vmem:[#allocation2 + $0x250] sm:$0xff]
        %v388 = vld [vmem:[#allocation2 + $0x258] sm:$0xff]
        %v389 = vld [vmem:[#allocation2 + $0x260] sm:$0xff]
        %v390 = vld [vmem:[#allocation2 + $0x268] sm:$0xff]
        %v391 = vld [vmem:[#allocation2 + $0x270] sm:$0xff]
        %v392 = vld [vmem:[#allocation2 + $0x278] sm:$0xff]
        %v393 = vld [vmem:[#allocation2 + $0x280] sm:$0xff]
        %v394 = vld [vmem:[#allocation2 + $0x288] sm:$0xff]
        %v395 = vld [vmem:[#allocation2 + $0x290] sm:$0xff]
        %v396 = vld [vmem:[#allocation2 + $0x298] sm:$0xff]
        %v397 = vld [vmem:[#allocation2 + $0x2a0] sm:$0xff]
        %v398 = vld [vmem:[#allocation2 + $0x2a8] sm:$0xff]
        %v399 = vld [vmem:[#allocation2 + $0x2b0] sm:$0xff]
        %v400 = vld [vmem:[#allocation2 + $0x2b8] sm:$0xff]
        %v401 = vld [vmem:[#allocation2 + $0x2c0] sm:$0xff]
        %v402 = vld [vmem:[#allocation2 + $0x2c8] sm:$0xff]
        %v403 = vld [vmem:[#allocation2 + $0x2d0] sm:$0xff]
        %v404 = vld [vmem:[#allocation2 + $0x2d8] sm:$0xff]
        %v405 = vld [vmem:[#allocation2 + $0x2e0] sm:$0xff]
        %v406 = vld [vmem:[#allocation2 + $0x2e8] sm:$0xff]
        %v407 = vld [vmem:[#allocation2 + $0x2f0] sm:$0xff]
        %v408 = vld [vmem:[#allocation2 + $0x2f8] sm:$0xff]
        %v409 = vld [vmem:[#allocation2 + $0x300] sm:$0xff]
        %v410 = vld [vmem:[#allocation2 + $0x308] sm:$0xff]
        %v411 = vld [vmem:[#allocation2 + $0x310] sm:$0xff]
        %v412 = vld [vmem:[#allocation2 + $0x318] sm:$0xff]
        %v413 = vld [vmem:[#allocation2 + $0x320] sm:$0xff]
        %v414 = vld [vmem:[#allocation2 + $0x328] sm:$0xff]
        %v415 = vld [vmem:[#allocation2 + $0x330] sm:$0xff]
        %v416 = vld [vmem:[#allocation2 + $0x338] sm:$0xff]
        %v417 = vld [vmem:[#allocation2 + $0x340] sm:$0xff]
        %v418 = vld [vmem:[#allocation2 + $0x348] sm:$0xff]
        %v419 = vld [vmem:[#allocation2 + $0x350] sm:$0xff]
        %v420 = vld [vmem:[#allocation2 + $0x358] sm:$0xff]
        %v421 = vld [vmem:[#allocation2 + $0x360] sm:$0xff]
        %v422 = vld [vmem:[#allocation2 + $0x368] sm:$0xff]
        %v423 = vld [vmem:[#allocation2 + $0x370] sm:$0xff]
        %v424 = vld [vmem:[#allocation2 + $0x378] sm:$0xff]
        %v425 = vld [vmem:[#allocation2 + $0x380] sm:$0xff]
        %v426 = vld [vmem:[#allocation2 + $0x388] sm:$0xff]
        %v427 = vld [vmem:[#allocation2 + $0x390] sm:$0xff]
        %v428 = vld [vmem:[#allocation2 + $0x398] sm:$0xff]
        %v429 = vld [vmem:[#allocation2 + $0x3a0] sm:$0xff]
        %v430 = vld [vmem:[#allocation2 + $0x3a8] sm:$0xff]
        %v431 = vld [vmem:[#allocation2 + $0x3b0] sm:$0xff]
        %v432 = vld [vmem:[#allocation2 + $0x3b8] sm:$0xff]
        %v433 = vld [vmem:[#allocation2 + $0x3c0] sm:$0xff]
        %v434 = vld [vmem:[#allocation2 + $0x3c8] sm:$0xff]
        %v435 = vld [vmem:[#allocation2 + $0x3d0] sm:$0xff]
        %v436 = vld [vmem:[#allocation2 + $0x3d8] sm:$0xff]
        %v437 = vld [vmem:[#allocation2 + $0x3e0] sm:$0xff]
        %v438 = vld [vmem:[#allocation2 + $0x3e8] sm:$0xff]
        %v439 = vld [vmem:[#allocation2 + $0x3f0] sm:$0xff]
        %v440 = vld [vmem:[#allocation2 + $0x3f8] sm:$0xff]
        %v569 = vunpack.c.l.b16 %v313
        %v570 = vunpack.c.h.b16 %v313
        %v571 = vunpack.c.l.b16 %v314
        %v572 = vunpack.c.h.b16 %v314
        %v573 = vunpack.c.l.b16 %v315
        %v574 = vunpack.c.h.b16 %v315
        %v575 = vunpack.c.l.b16 %v316
        %v576 = vunpack.c.h.b16 %v316
        %v577 = vunpack.c.l.b16 %v317
        %v578 = vunpack.c.h.b16 %v317
        %v579 = vunpack.c.l.b16 %v318
        %v580 = vunpack.c.h.b16 %v318
        %v581 = vunpack.c.l.b16 %v319
        %v582 = vunpack.c.h.b16 %v319
        %v583 = vunpack.c.l.b16 %v320
        %v584 = vunpack.c.h.b16 %v320
        %v585 = vunpack.c.l.b16 %v321
        %v586 = vunpack.c.h.b16 %v321
        %v587 = vunpack.c.l.b16 %v322
        %v588 = vunpack.c.h.b16 %v322
        %v589 = vunpack.c.l.b16 %v323
        %v590 = vunpack.c.h.b16 %v323
        %v591 = vunpack.c.l.b16 %v324
        %v592 = vunpack.c.h.b16 %v324
        %v593 = vunpack.c.l.b16 %v325
        %v594 = vunpack.c.h.b16 %v325
        %v595 = vunpack.c.l.b16 %v326
        %v596 = vunpack.c.h.b16 %v326
        %v597 = vunpack.c.l.b16 %v327
        %v598 = vunpack.c.h.b16 %v327
        %v599 = vunpack.c.l.b16 %v328
        %v600 = vunpack.c.h.b16 %v328
        %v601 = vunpack.c.l.b16 %v329
        %v602 = vunpack.c.h.b16 %v329
        %v603 = vunpack.c.l.b16 %v330
        %v604 = vunpack.c.h.b16 %v330
        %v605 = vunpack.c.l.b16 %v331
        %v606 = vunpack.c.h.b16 %v331
        %v607 = vunpack.c.l.b16 %v332
        %v608 = vunpack.c.h.b16 %v332
        %v609 = vunpack.c.l.b16 %v333
        %v610 = vunpack.c.h.b16 %v333
        %v611 = vunpack.c.l.b16 %v334
        %v612 = vunpack.c.h.b16 %v334
        %v613 = vunpack.c.l.b16 %v335
        %v614 = vunpack.c.h.b16 %v335
        %v615 = vunpack.c.l.b16 %v336
        %v616 = vunpack.c.h.b16 %v336
        %v617 = vunpack.c.l.b16 %v337
        %v618 = vunpack.c.h.b16 %v337
        %v619 = vunpack.c.l.b16 %v338
        %v620 = vunpack.c.h.b16 %v338
        %v621 = vunpack.c.l.b16 %v339
        %v622 = vunpack.c.h.b16 %v339
        %v623 = vunpack.c.l.b16 %v340
        %v624 = vunpack.c.h.b16 %v340
        %v625 = vunpack.c.l.b16 %v341
        %v626 = vunpack.c.h.b16 %v341
        %v627 = vunpack.c.l.b16 %v342
        %v628 = vunpack.c.h.b16 %v342
        %v629 = vunpack.c.l.b16 %v343
        %v630 = vunpack.c.h.b16 %v343
        %v631 = vunpack.c.l.b16 %v344
        %v632 = vunpack.c.h.b16 %v344
        %v633 = vunpack.c.l.b16 %v345
        %v634 = vunpack.c.h.b16 %v345
        %v635 = vunpack.c.l.b16 %v346
        %v636 = vunpack.c.h.b16 %v346
        %v637 = vunpack.c.l.b16 %v347
        %v638 = vunpack.c.h.b16 %v347
        %v639 = vunpack.c.l.b16 %v348
        %v640 = vunpack.c.h.b16 %v348
        %v641 = vunpack.c.l.b16 %v349
        %v642 = vunpack.c.h.b16 %v349
        %v643 = vunpack.c.l.b16 %v350
        %v644 = vunpack.c.h.b16 %v350
        %v645 = vunpack.c.l.b16 %v351
        %v646 = vunpack.c.h.b16 %v351
        %v647 = vunpack.c.l.b16 %v352
        %v648 = vunpack.c.h.b16 %v352
        %v649 = vunpack.c.l.b16 %v353
        %v650 = vunpack.c.h.b16 %v353
        %v651 = vunpack.c.l.b16 %v354
        %v652 = vunpack.c.h.b16 %v354
        %v653 = vunpack.c.l.b16 %v355
        %v654 = vunpack.c.h.b16 %v355
        %v655 = vunpack.c.l.b16 %v356
        %v656 = vunpack.c.h.b16 %v356
        %v657 = vunpack.c.l.b16 %v357
        %v658 = vunpack.c.h.b16 %v357
        %v659 = vunpack.c.l.b16 %v358
        %v660 = vunpack.c.h.b16 %v358
        %v661 = vunpack.c.l.b16 %v359
        %v662 = vunpack.c.h.b16 %v359
        %v663 = vunpack.c.l.b16 %v360
        %v664 = vunpack.c.h.b16 %v360
        %v665 = vunpack.c.l.b16 %v361
        %v666 = vunpack.c.h.b16 %v361
        %v667 = vunpack.c.l.b16 %v362
        %v668 = vunpack.c.h.b16 %v362
        %v669 = vunpack.c.l.b16 %v363
        %v670 = vunpack.c.h.b16 %v363
        %v671 = vunpack.c.l.b16 %v364
        %v672 = vunpack.c.h.b16 %v364
        %v673 = vunpack.c.l.b16 %v365
        %v674 = vunpack.c.h.b16 %v365
        %v675 = vunpack.c.l.b16 %v366
        %v676 = vunpack.c.h.b16 %v366
        %v677 = vunpack.c.l.b16 %v367
        %v678 = vunpack.c.h.b16 %v367
        %v679 = vunpack.c.l.b16 %v368
        %v680 = vunpack.c.h.b16 %v368
        %v681 = vunpack.c.l.b16 %v369
        %v682 = vunpack.c.h.b16 %v369
        %v683 = vunpack.c.l.b16 %v370
        %v684 = vunpack.c.h.b16 %v370
        %v685 = vunpack.c.l.b16 %v371
        %v686 = vunpack.c.h.b16 %v371
        %v687 = vunpack.c.l.b16 %v372
        %v688 = vunpack.c.h.b16 %v372
        %v689 = vunpack.c.l.b16 %v373
        %v690 = vunpack.c.h.b16 %v373
        %v691 = vunpack.c.l.b16 %v374
        %v692 = vunpack.c.h.b16 %v374
        %v693 = vunpack.c.l.b16 %v375
        %v694 = vunpack.c.h.b16 %v375
        %v695 = vunpack.c.l.b16 %v376
        %v696 = vunpack.c.h.b16 %v376
        %v697 = vunpack.c.l.b16 %v377
        %v698 = vunpack.c.h.b16 %v377
        %v699 = vunpack.c.l.b16 %v378
        %v700 = vunpack.c.h.b16 %v378
        %v701 = vunpack.c.l.b16 %v379
        %v702 = vunpack.c.h.b16 %v379
        %v703 = vunpack.c.l.b16 %v380
        %v704 = vunpack.c.h.b16 %v380
        %v705 = vunpack.c.l.b16 %v381
        %v706 = vunpack.c.h.b16 %v381
        %v707 = vunpack.c.l.b16 %v382
        %v708 = vunpack.c.h.b16 %v382
        %v709 = vunpack.c.l.b16 %v383
        %v710 = vunpack.c.h.b16 %v383
        %v711 = vunpack.c.l.b16 %v384
        %v712 = vunpack.c.h.b16 %v384
        %v713 = vunpack.c.l.b16 %v385
        %v714 = vunpack.c.h.b16 %v385
        %v715 = vunpack.c.l.b16 %v386
        %v716 = vunpack.c.h.b16 %v386
        %v717 = vunpack.c.l.b16 %v387
        %v718 = vunpack.c.h.b16 %v387
        %v719 = vunpack.c.l.b16 %v388
        %v720 = vunpack.c.h.b16 %v388
        %v721 = vunpack.c.l.b16 %v389
        %v722 = vunpack.c.h.b16 %v389
        %v723 = vunpack.c.l.b16 %v390
        %v724 = vunpack.c.h.b16 %v390
        %v725 = vunpack.c.l.b16 %v391
        %v726 = vunpack.c.h.b16 %v391
        %v727 = vunpack.c.l.b16 %v392
        %v728 = vunpack.c.h.b16 %v392
        %v729 = vunpack.c.l.b16 %v393
        %v730 = vunpack.c.h.b16 %v393
        %v731 = vunpack.c.l.b16 %v394
        %v732 = vunpack.c.h.b16 %v394
        %v733 = vunpack.c.l.b16 %v395
        %v734 = vunpack.c.h.b16 %v395
        %v735 = vunpack.c.l.b16 %v396
        %v736 = vunpack.c.h.b16 %v396
        %v737 = vunpack.c.l.b16 %v397
        %v738 = vunpack.c.h.b16 %v397
        %v739 = vunpack.c.l.b16 %v398
        %v740 = vunpack.c.h.b16 %v398
        %v741 = vunpack.c.l.b16 %v399
        %v742 = vunpack.c.h.b16 %v399
        %v743 = vunpack.c.l.b16 %v400
        %v744 = vunpack.c.h.b16 %v400
        %v745 = vunpack.c.l.b16 %v401
        %v746 = vunpack.c.h.b16 %v401
        %v747 = vunpack.c.l.b16 %v402
        %v748 = vunpack.c.h.b16 %v402
        %v749 = vunpack.c.l.b16 %v403
        %v750 = vunpack.c.h.b16 %v403
        %v751 = vunpack.c.l.b16 %v404
        %v752 = vunpack.c.h.b16 %v404
        %v753 = vunpack.c.l.b16 %v405
        %v754 = vunpack.c.h.b16 %v405
        %v755 = vunpack.c.l.b16 %v406
        %v756 = vunpack.c.h.b16 %v406
        %v757 = vunpack.c.l.b16 %v407
        %v758 = vunpack.c.h.b16 %v407
        %v759 = vunpack.c.l.b16 %v408
        %v760 = vunpack.c.h.b16 %v408
        %v761 = vunpack.c.l.b16 %v409
        %v762 = vunpack.c.h.b16 %v409
        %v763 = vunpack.c.l.b16 %v410
        %v764 = vunpack.c.h.b16 %v410
        %v765 = vunpack.c.l.b16 %v411
        %v766 = vunpack.c.h.b16 %v411
        %v767 = vunpack.c.l.b16 %v412
        %v768 = vunpack.c.h.b16 %v412
        %v769 = vunpack.c.l.b16 %v413
        %v770 = vunpack.c.h.b16 %v413
        %v771 = vunpack.c.l.b16 %v414
        %v772 = vunpack.c.h.b16 %v414
        %v773 = vunpack.c.l.b16 %v415
        %v774 = vunpack.c.h.b16 %v415
        %v775 = vunpack.c.l.b16 %v416
        %v776 = vunpack.c.h.b16 %v416
        %v777 = vunpack.c.l.b16 %v417
        %v778 = vunpack.c.h.b16 %v417
        %v779 = vunpack.c.l.b16 %v418
        %v780 = vunpack.c.h.b16 %v418
        %v781 = vunpack.c.l.b16 %v419
        %v782 = vunpack.c.h.b16 %v419
        %v783 = vunpack.c.l.b16 %v420
        %v784 = vunpack.c.h.b16 %v420
        %v785 = vunpack.c.l.b16 %v421
        %v786 = vunpack.c.h.b16 %v421
        %v787 = vunpack.c.l.b16 %v422
        %v788 = vunpack.c.h.b16 %v422
        %v789 = vunpack.c.l.b16 %v423
        %v790 = vunpack.c.h.b16 %v423
        %v791 = vunpack.c.l.b16 %v424
        %v792 = vunpack.c.h.b16 %v424
        %v793 = vunpack.c.l.b16 %v425
        %v794 = vunpack.c.h.b16 %v425
        %v795 = vunpack.c.l.b16 %v426
        %v796 = vunpack.c.h.b16 %v426
        %v797 = vunpack.c.l.b16 %v427
        %v798 = vunpack.c.h.b16 %v427
        %v799 = vunpack.c.l.b16 %v428
        %v800 = vunpack.c.h.b16 %v428
        %v801 = vunpack.c.l.b16 %v429
        %v802 = vunpack.c.h.b16 %v429
        %v803 = vunpack.c.l.b16 %v430
        %v804 = vunpack.c.h.b16 %v430
        %v805 = vunpack.c.l.b16 %v431
        %v806 = vunpack.c.h.b16 %v431
        %v807 = vunpack.c.l.b16 %v432
        %v808 = vunpack.c.h.b16 %v432
        %v809 = vunpack.c.l.b16 %v433
        %v810 = vunpack.c.h.b16 %v433
        %v811 = vunpack.c.l.b16 %v434
        %v812 = vunpack.c.h.b16 %v434
        %v813 = vunpack.c.l.b16 %v435
        %v814 = vunpack.c.h.b16 %v435
        %v815 = vunpack.c.l.b16 %v436
        %v816 = vunpack.c.h.b16 %v436
        %v817 = vunpack.c.l.b16 %v437
        %v818 = vunpack.c.h.b16 %v437
        %v819 = vunpack.c.l.b16 %v438
        %v820 = vunpack.c.h.b16 %v438
        %v821 = vunpack.c.l.b16 %v439
        %v822 = vunpack.c.h.b16 %v439
        %v823 = vunpack.c.l.b16 %v440
        %v824 = vunpack.c.h.b16 %v440
        %v825 = vpack.c.b16 %v577, %v569
        %v826 = vpack.c.b16 %v578, %v570
        %v827 = vpack.c.b16 %v579, %v571
        %v828 = vpack.c.b16 %v580, %v572
        %v829 = vpack.c.b16 %v581, %v573
        %v830 = vpack.c.b16 %v582, %v574
        %v831 = vpack.c.b16 %v583, %v575
        %v832 = vpack.c.b16 %v584, %v576
        %v833 = vpack.c.b16 %v593, %v585
        %v834 = vpack.c.b16 %v594, %v586
        %v835 = vpack.c.b16 %v595, %v587
        %v836 = vpack.c.b16 %v596, %v588
        %v837 = vpack.c.b16 %v597, %v589
        %v838 = vpack.c.b16 %v598, %v590
        %v839 = vpack.c.b16 %v599, %v591
        %v840 = vpack.c.b16 %v600, %v592
        %v841 = vpack.c.b16 %v609, %v601
        %v842 = vpack.c.b16 %v610, %v602
        %v843 = vpack.c.b16 %v611, %v603
        %v844 = vpack.c.b16 %v612, %v604
        %v845 = vpack.c.b16 %v613, %v605
        %v846 = vpack.c.b16 %v614, %v606
        %v847 = vpack.c.b16 %v615, %v607
        %v848 = vpack.c.b16 %v616, %v608
        %v849 = vpack.c.b16 %v625, %v617
        %v850 = vpack.c.b16 %v626, %v618
        %v851 = vpack.c.b16 %v627, %v619
        %v852 = vpack.c.b16 %v628, %v620
        %v853 = vpack.c.b16 %v629, %v621
        %v854 = vpack.c.b16 %v630, %v622
        %v855 = vpack.c.b16 %v631, %v623
        %v856 = vpack.c.b16 %v632, %v624
        %v857 = vpack.c.b16 %v641, %v633
        %v858 = vpack.c.b16 %v642, %v634
        %v859 = vpack.c.b16 %v643, %v635
        %v860 = vpack.c.b16 %v644, %v636
        %v861 = vpack.c.b16 %v645, %v637
        %v862 = vpack.c.b16 %v646, %v638
        %v863 = vpack.c.b16 %v647, %v639
        %v864 = vpack.c.b16 %v648, %v640
        %v865 = vpack.c.b16 %v657, %v649
        %v866 = vpack.c.b16 %v658, %v650
        %v867 = vpack.c.b16 %v659, %v651
        %v868 = vpack.c.b16 %v660, %v652
        %v869 = vpack.c.b16 %v661, %v653
        %v870 = vpack.c.b16 %v662, %v654
        %v871 = vpack.c.b16 %v663, %v655
        %v872 = vpack.c.b16 %v664, %v656
        %v873 = vpack.c.b16 %v673, %v665
        %v874 = vpack.c.b16 %v674, %v666
        %v875 = vpack.c.b16 %v675, %v667
        %v876 = vpack.c.b16 %v676, %v668
        %v877 = vpack.c.b16 %v677, %v669
        %v878 = vpack.c.b16 %v678, %v670
        %v879 = vpack.c.b16 %v679, %v671
        %v880 = vpack.c.b16 %v680, %v672
        %v881 = vpack.c.b16 %v689, %v681
        %v882 = vpack.c.b16 %v690, %v682
        %v883 = vpack.c.b16 %v691, %v683
        %v884 = vpack.c.b16 %v692, %v684
        %v885 = vpack.c.b16 %v693, %v685
        %v886 = vpack.c.b16 %v694, %v686
        %v887 = vpack.c.b16 %v695, %v687
        %v888 = vpack.c.b16 %v696, %v688
        %v889 = vpack.c.b16 %v705, %v697
        %v890 = vpack.c.b16 %v706, %v698
        %v891 = vpack.c.b16 %v707, %v699
        %v892 = vpack.c.b16 %v708, %v700
        %v893 = vpack.c.b16 %v709, %v701
        %v894 = vpack.c.b16 %v710, %v702
        %v895 = vpack.c.b16 %v711, %v703
        %v896 = vpack.c.b16 %v712, %v704
        %v897 = vpack.c.b16 %v721, %v713
        %v898 = vpack.c.b16 %v722, %v714
        %v899 = vpack.c.b16 %v723, %v715
        %v900 = vpack.c.b16 %v724, %v716
        %v901 = vpack.c.b16 %v725, %v717
        %v902 = vpack.c.b16 %v726, %v718
        %v903 = vpack.c.b16 %v727, %v719
        %v904 = vpack.c.b16 %v728, %v720
        %v905 = vpack.c.b16 %v737, %v729
        %v906 = vpack.c.b16 %v738, %v730
        %v907 = vpack.c.b16 %v739, %v731
        %v908 = vpack.c.b16 %v740, %v732
        %v909 = vpack.c.b16 %v741, %v733
        %v910 = vpack.c.b16 %v742, %v734
        %v911 = vpack.c.b16 %v743, %v735
        %v912 = vpack.c.b16 %v744, %v736
        %v913 = vpack.c.b16 %v753, %v745
        %v914 = vpack.c.b16 %v754, %v746
        %v915 = vpack.c.b16 %v755, %v747
        %v916 = vpack.c.b16 %v756, %v748
        %v917 = vpack.c.b16 %v757, %v749
        %v918 = vpack.c.b16 %v758, %v750
        %v919 = vpack.c.b16 %v759, %v751
        %v920 = vpack.c.b16 %v760, %v752
        %v921 = vpack.c.b16 %v769, %v761
        %v922 = vpack.c.b16 %v770, %v762
        %v923 = vpack.c.b16 %v771, %v763
        %v924 = vpack.c.b16 %v772, %v764
        %v925 = vpack.c.b16 %v773, %v765
        %v926 = vpack.c.b16 %v774, %v766
        %v927 = vpack.c.b16 %v775, %v767
        %v928 = vpack.c.b16 %v776, %v768
        %v929 = vpack.c.b16 %v785, %v777
        %v930 = vpack.c.b16 %v786, %v778
        %v931 = vpack.c.b16 %v787, %v779
        %v932 = vpack.c.b16 %v788, %v780
        %v933 = vpack.c.b16 %v789, %v781
        %v934 = vpack.c.b16 %v790, %v782
        %v935 = vpack.c.b16 %v791, %v783
        %v936 = vpack.c.b16 %v792, %v784
        %v937 = vpack.c.b16 %v801, %v793
        %v938 = vpack.c.b16 %v802, %v794
        %v939 = vpack.c.b16 %v803, %v795
        %v940 = vpack.c.b16 %v804, %v796
        %v941 = vpack.c.b16 %v805, %v797
        %v942 = vpack.c.b16 %v806, %v798
        %v943 = vpack.c.b16 %v807, %v799
        %v944 = vpack.c.b16 %v808, %v800
        %v945 = vpack.c.b16 %v817, %v809
        %v946 = vpack.c.b16 %v818, %v810
        %v947 = vpack.c.b16 %v819, %v811
        %v948 = vpack.c.b16 %v820, %v812
        %v949 = vpack.c.b16 %v821, %v813
        %v950 = vpack.c.b16 %v822, %v814
        %v951 = vpack.c.b16 %v823, %v815
        %v952 = vpack.c.b16 %v824, %v816
        %1081 = vmatpush.bf16.msra.mxu0 %v881
        %1082 = vmatpush.bf16.msra.mxu0 %v873
        %1083 = vmatpush.bf16.msra.mxu0 %v865
        %1084 = vmatpush.bf16.msra.mxu0 %v857
        %1085 = vmatpush.bf16.msra.mxu0 %v849
        %1086 = vmatpush.bf16.msra.mxu0 %v841
        %1087 = vmatpush.bf16.msra.mxu0 %v833
        %1088 = vmatpush.bf16.msra.mxu0 %v825
        %1089 = vmatmul.bf16.gmra.mxu0 %v311
        %v1090 = vpop.f32.mrf.mxu0
        %v1091 = vadd.f32 0.0, %v1090
        %v1092 = vpop.f32.mrf.mxu0
        %1093 = vdwg.mxu0
        %1094 = vmatpush.bf16.msra.mxu0 %v945
        %1095 = vmatpush.bf16.msra.mxu0 %v937
        %1096 = vmatpush.bf16.msra.mxu0 %v929
        %1097 = vmatpush.bf16.msra.mxu0 %v921
        %1098 = vmatpush.bf16.msra.mxu0 %v913
        %1099 = vmatpush.bf16.msra.mxu0 %v905
        %1100 = vmatpush.bf16.msra.mxu0 %v897
        %1101 = vmatpush.bf16.msra.mxu0 %v889
        %1102 = vmatmul.bf16.gmra.mxu0 %v312
        %v1103 = vpop.f32.mrf.mxu0
        %v1104 = vadd.f32 %v1091, %v1103
        %v1105 = vpop.f32.mrf.mxu0
        %1106 = vdwg.mxu0
        %1107 = vmatpush.bf16.msra.mxu0 %v882
        %1108 = vmatpush.bf16.msra.mxu0 %v874
        %1109 = vmatpush.bf16.msra.mxu0 %v866
        %1110 = vmatpush.bf16.msra.mxu0 %v858
        %1111 = vmatpush.bf16.msra.mxu0 %v850
        %1112 = vmatpush.bf16.msra.mxu0 %v842
        %1113 = vmatpush.bf16.msra.mxu0 %v834
        %1114 = vmatpush.bf16.msra.mxu0 %v826
        %1115 = vmatmul.bf16.gmra.mxu0 %v311
        %v1116 = vpop.f32.mrf.mxu0
        %v1117 = vadd.f32 0.0, %v1116
        %v1118 = vpop.f32.mrf.mxu0
        %1119 = vdwg.mxu0
        %1120 = vmatpush.bf16.msra.mxu0 %v946
        %1121 = vmatpush.bf16.msra.mxu0 %v938
        %1122 = vmatpush.bf16.msra.mxu0 %v930
        %1123 = vmatpush.bf16.msra.mxu0 %v922
        %1124 = vmatpush.bf16.msra.mxu0 %v914
        %1125 = vmatpush.bf16.msra.mxu0 %v906
        %1126 = vmatpush.bf16.msra.mxu0 %v898
        %1127 = vmatpush.bf16.msra.mxu0 %v890
        %1128 = vmatmul.bf16.gmra.mxu0 %v312
        %v1129 = vpop.f32.mrf.mxu0
        %v1130 = vadd.f32 %v1117, %v1129
        %v1131 = vpop.f32.mrf.mxu0
        %1132 = vdwg.mxu0
        %1133 = vmatpush.bf16.msra.mxu0 %v883
        %1134 = vmatpush.bf16.msra.mxu0 %v875
        %1135 = vmatpush.bf16.msra.mxu0 %v867
        %1136 = vmatpush.bf16.msra.mxu0 %v859
        %1137 = vmatpush.bf16.msra.mxu0 %v851
        %1138 = vmatpush.bf16.msra.mxu0 %v843
        %1139 = vmatpush.bf16.msra.mxu0 %v835
        %1140 = vmatpush.bf16.msra.mxu0 %v827
        %1141 = vmatmul.bf16.gmra.mxu0 %v311
        %v1142 = vpop.f32.mrf.mxu0
        %v1143 = vadd.f32 0.0, %v1142
        %v1144 = vpop.f32.mrf.mxu0
        %1145 = vdwg.mxu0
        %1146 = vmatpush.bf16.msra.mxu0 %v947
        %1147 = vmatpush.bf16.msra.mxu0 %v939
        %1148 = vmatpush.bf16.msra.mxu0 %v931
        %1149 = vmatpush.bf16.msra.mxu0 %v923
        %1150 = vmatpush.bf16.msra.mxu0 %v915
        %1151 = vmatpush.bf16.msra.mxu0 %v907
        %1152 = vmatpush.bf16.msra.mxu0 %v899
        %1153 = vmatpush.bf16.msra.mxu0 %v891
        %1154 = vmatmul.bf16.gmra.mxu0 %v312
        %v1155 = vpop.f32.mrf.mxu0
        %v1156 = vadd.f32 %v1143, %v1155
        %v1157 = vpop.f32.mrf.mxu0
        %1158 = vdwg.mxu0
        %1159 = vmatpush.bf16.msra.mxu0 %v884
        %1160 = vmatpush.bf16.msra.mxu0 %v876
        %1161 = vmatpush.bf16.msra.mxu0 %v868
        %1162 = vmatpush.bf16.msra.mxu0 %v860
        %1163 = vmatpush.bf16.msra.mxu0 %v852
        %1164 = vmatpush.bf16.msra.mxu0 %v844
        %1165 = vmatpush.bf16.msra.mxu0 %v836
        %1166 = vmatpush.bf16.msra.mxu0 %v828
        %1167 = vmatmul.bf16.gmra.mxu0 %v311
        %v1168 = vpop.f32.mrf.mxu0
        %v1169 = vadd.f32 0.0, %v1168
        %v1170 = vpop.f32.mrf.mxu0
        %1171 = vdwg.mxu0
        %1172 = vmatpush.bf16.msra.mxu0 %v948
        %1173 = vmatpush.bf16.msra.mxu0 %v940
        %1174 = vmatpush.bf16.msra.mxu0 %v932
        %1175 = vmatpush.bf16.msra.mxu0 %v924
        %1176 = vmatpush.bf16.msra.mxu0 %v916
        %1177 = vmatpush.bf16.msra.mxu0 %v908
        %1178 = vmatpush.bf16.msra.mxu0 %v900
        %1179 = vmatpush.bf16.msra.mxu0 %v892
        %1180 = vmatmul.bf16.gmra.mxu0 %v312
        %v1181 = vpop.f32.mrf.mxu0
        %v1182 = vadd.f32 %v1169, %v1181
        %v1183 = vpop.f32.mrf.mxu0
        %1184 = vdwg.mxu0
        %1185 = vmatpush.bf16.msra.mxu0 %v885
        %1186 = vmatpush.bf16.msra.mxu0 %v877
        %1187 = vmatpush.bf16.msra.mxu0 %v869
        %1188 = vmatpush.bf16.msra.mxu0 %v861
        %1189 = vmatpush.bf16.msra.mxu0 %v853
        %1190 = vmatpush.bf16.msra.mxu0 %v845
        %1191 = vmatpush.bf16.msra.mxu0 %v837
        %1192 = vmatpush.bf16.msra.mxu0 %v829
        %1193 = vmatmul.bf16.gmra.mxu0 %v311
        %v1194 = vpop.f32.mrf.mxu0
        %v1195 = vadd.f32 0.0, %v1194
        %v1196 = vpop.f32.mrf.mxu0
        %1197 = vdwg.mxu0
        %1198 = vmatpush.bf16.msra.mxu0 %v949
        %1199 = vmatpush.bf16.msra.mxu0 %v941
        %1200 = vmatpush.bf16.msra.mxu0 %v933
        %1201 = vmatpush.bf16.msra.mxu0 %v925
        %1202 = vmatpush.bf16.msra.mxu0 %v917
        %1203 = vmatpush.bf16.msra.mxu0 %v909
        %1204 = vmatpush.bf16.msra.mxu0 %v901
        %1205 = vmatpush.bf16.msra.mxu0 %v893
        %1206 = vmatmul.bf16.gmra.mxu0 %v312
        %v1207 = vpop.f32.mrf.mxu0
        %v1208 = vadd.f32 %v1195, %v1207
        %v1209 = vpop.f32.mrf.mxu0
        %1210 = vdwg.mxu0
        %1211 = vmatpush.bf16.msra.mxu0 %v886
        %1212 = vmatpush.bf16.msra.mxu0 %v878
        %1213 = vmatpush.bf16.msra.mxu0 %v870
        %1214 = vmatpush.bf16.msra.mxu0 %v862
        %1215 = vmatpush.bf16.msra.mxu0 %v854
        %1216 = vmatpush.bf16.msra.mxu0 %v846
        %1217 = vmatpush.bf16.msra.mxu0 %v838
        %1218 = vmatpush.bf16.msra.mxu0 %v830
        %1219 = vmatmul.bf16.gmra.mxu0 %v311
        %v1220 = vpop.f32.mrf.mxu0
        %v1221 = vadd.f32 0.0, %v1220
        %v1222 = vpop.f32.mrf.mxu0
        %1223 = vdwg.mxu0
        %1224 = vmatpush.bf16.msra.mxu0 %v950
        %1225 = vmatpush.bf16.msra.mxu0 %v942
        %1226 = vmatpush.bf16.msra.mxu0 %v934
        %1227 = vmatpush.bf16.msra.mxu0 %v926
        %1228 = vmatpush.bf16.msra.mxu0 %v918
        %1229 = vmatpush.bf16.msra.mxu0 %v910
        %1230 = vmatpush.bf16.msra.mxu0 %v902
        %1231 = vmatpush.bf16.msra.mxu0 %v894
        %1232 = vmatmul.bf16.gmra.mxu0 %v312
        %v1233 = vpop.f32.mrf.mxu0
        %v1234 = vadd.f32 %v1221, %v1233
        %v1235 = vpop.f32.mrf.mxu0
        %1236 = vdwg.mxu0
        %1237 = vmatpush.bf16.msra.mxu0 %v887
        %1238 = vmatpush.bf16.msra.mxu0 %v879
        %1239 = vmatpush.bf16.msra.mxu0 %v871
        %1240 = vmatpush.bf16.msra.mxu0 %v863
        %1241 = vmatpush.bf16.msra.mxu0 %v855
        %1242 = vmatpush.bf16.msra.mxu0 %v847
        %1243 = vmatpush.bf16.msra.mxu0 %v839
        %1244 = vmatpush.bf16.msra.mxu0 %v831
        %1245 = vmatmul.bf16.gmra.mxu0 %v311
        %v1246 = vpop.f32.mrf.mxu0
        %v1247 = vadd.f32 0.0, %v1246
        %v1248 = vpop.f32.mrf.mxu0
        %1249 = vdwg.mxu0
        %1250 = vmatpush.bf16.msra.mxu0 %v951
        %1251 = vmatpush.bf16.msra.mxu0 %v943
        %1252 = vmatpush.bf16.msra.mxu0 %v935
        %1253 = vmatpush.bf16.msra.mxu0 %v927
        %1254 = vmatpush.bf16.msra.mxu0 %v919
        %1255 = vmatpush.bf16.msra.mxu0 %v911
        %1256 = vmatpush.bf16.msra.mxu0 %v903
        %1257 = vmatpush.bf16.msra.mxu0 %v895
        %1258 = vmatmul.bf16.gmra.mxu0 %v312
        %v1259 = vpop.f32.mrf.mxu0
        %v1260 = vadd.f32 %v1247, %v1259
        %v1261 = vpop.f32.mrf.mxu0
        %1262 = vdwg.mxu0
        %1263 = vmatpush.bf16.msra.mxu0 %v888
        %1264 = vmatpush.bf16.msra.mxu0 %v880
        %1265 = vmatpush.bf16.msra.mxu0 %v872
        %1266 = vmatpush.bf16.msra.mxu0 %v864
        %1267 = vmatpush.bf16.msra.mxu0 %v856
        %1268 = vmatpush.bf16.msra.mxu0 %v848
        %1269 = vmatpush.bf16.msra.mxu0 %v840
        %1270 = vmatpush.bf16.msra.mxu0 %v832
        %1271 = vmatmul.bf16.gmra.mxu0 %v311
        %v1272 = vpop.f32.mrf.mxu0
        %v1273 = vadd.f32 0.0, %v1272
        %v1274 = vpop.f32.mrf.mxu0
        %1275 = vdwg.mxu0
        %1276 = vmatpush.bf16.msra.mxu0 %v952
        %1277 = vmatpush.bf16.msra.mxu0 %v944
        %1278 = vmatpush.bf16.msra.mxu0 %v936
        %1279 = vmatpush.bf16.msra.mxu0 %v928
        %1280 = vmatpush.bf16.msra.mxu0 %v920
        %1281 = vmatpush.bf16.msra.mxu0 %v912
        %1282 = vmatpush.bf16.msra.mxu0 %v904
        %1283 = vmatpush.bf16.msra.mxu0 %v896
        %1284 = vmatmul.bf16.gmra.mxu0 %v312
        %v1285 = vpop.f32.mrf.mxu0
        %v1286 = vadd.f32 %v1273, %v1285
        %v1287 = vpop.f32.mrf.mxu0
        %1288 = vdwg.mxu0
        %v1289 = vld [vmem:[%s293] sm:$0x3]
        %v1290 = vpack.c.bf16 %v1289, %v1289
        %v1291 = vld [vmem:[%s2] sm:$0xff]
        %v1292 = vld [vmem:[%s2 + $0x8] sm:$0xff]
        %v1293 = vld [vmem:[%s2 + $0x10] sm:$0xff]
        %v1294 = vld [vmem:[%s2 + $0x18] sm:$0xff]
        %v1295 = vld [vmem:[%s2 + $0x20] sm:$0xff]
        %v1296 = vld [vmem:[%s2 + $0x28] sm:$0xff]
        %v1297 = vld [vmem:[%s2 + $0x30] sm:$0xff]
        %v1298 = vld [vmem:[%s2 + $0x38] sm:$0xff]
        %v1299 = vld [vmem:[%s2 + $0x40] sm:$0xff]
        %v1300 = vld [vmem:[%s2 + $0x48] sm:$0xff]
        %v1301 = vld [vmem:[%s2 + $0x50] sm:$0xff]
        %v1302 = vld [vmem:[%s2 + $0x58] sm:$0xff]
        %v1303 = vld [vmem:[%s2 + $0x60] sm:$0xff]
        %v1304 = vld [vmem:[%s2 + $0x68] sm:$0xff]
        %v1305 = vld [vmem:[%s2 + $0x70] sm:$0xff]
        %v1306 = vld [vmem:[%s2 + $0x78] sm:$0xff]
        %v1323 = vunpack.c.l.b16 %v1291
        %v1324 = vunpack.c.h.b16 %v1291
        %v1325 = vunpack.c.l.b16 %v1292
        %v1326 = vunpack.c.h.b16 %v1292
        %v1327 = vunpack.c.l.b16 %v1293
        %v1328 = vunpack.c.h.b16 %v1293
        %v1329 = vunpack.c.l.b16 %v1294
        %v1330 = vunpack.c.h.b16 %v1294
        %v1331 = vunpack.c.l.b16 %v1295
        %v1332 = vunpack.c.h.b16 %v1295
        %v1333 = vunpack.c.l.b16 %v1296
        %v1334 = vunpack.c.h.b16 %v1296
        %v1335 = vunpack.c.l.b16 %v1297
        %v1336 = vunpack.c.h.b16 %v1297
        %v1337 = vunpack.c.l.b16 %v1298
        %v1338 = vunpack.c.h.b16 %v1298
        %v1339 = vunpack.c.l.b16 %v1299
        %v1340 = vunpack.c.h.b16 %v1299
        %v1341 = vunpack.c.l.b16 %v1300
        %v1342 = vunpack.c.h.b16 %v1300
        %v1343 = vunpack.c.l.b16 %v1301
        %v1344 = vunpack.c.h.b16 %v1301
        %v1345 = vunpack.c.l.b16 %v1302
        %v1346 = vunpack.c.h.b16 %v1302
        %v1347 = vunpack.c.l.b16 %v1303
        %v1348 = vunpack.c.h.b16 %v1303
        %v1349 = vunpack.c.l.b16 %v1304
        %v1350 = vunpack.c.h.b16 %v1304
        %v1351 = vunpack.c.l.b16 %v1305
        %v1352 = vunpack.c.h.b16 %v1305
        %v1353 = vunpack.c.l.b16 %v1306
        %v1354 = vunpack.c.h.b16 %v1306
        %v1355 = vpack.c.b16 %v1331, %v1323
        %v1356 = vpack.c.b16 %v1332, %v1324
        %v1357 = vpack.c.b16 %v1333, %v1325
        %v1358 = vpack.c.b16 %v1334, %v1326
        %v1359 = vpack.c.b16 %v1335, %v1327
        %v1360 = vpack.c.b16 %v1336, %v1328
        %v1361 = vpack.c.b16 %v1337, %v1329
        %v1362 = vpack.c.b16 %v1338, %v1330
        %v1363 = vpack.c.b16 %v1347, %v1339
        %v1364 = vpack.c.b16 %v1348, %v1340
        %v1365 = vpack.c.b16 %v1349, %v1341
        %v1366 = vpack.c.b16 %v1350, %v1342
        %v1367 = vpack.c.b16 %v1351, %v1343
        %v1368 = vpack.c.b16 %v1352, %v1344
        %v1369 = vpack.c.b16 %v1353, %v1345
        %v1370 = vpack.c.b16 %v1354, %v1346
        %vm1387 = vcmask 261120
        %v1389 = vsel %vm1387, %v1290, 0
        %1391 = vmatpush.bf16.msra.mxu0 0
        %1392 = vmatpush.bf16.msra.mxu0 0
        %1393 = vmatpush.bf16.msra.mxu0 0
        %1394 = vmatpush.bf16.msra.mxu0 0
        %1395 = vmatpush.bf16.msra.mxu0 0
        %1396 = vmatpush.bf16.msra.mxu0 0
        %1397 = vmatpush.bf16.msra.mxu0 %v1363
        %1398 = vmatpush.bf16.msra.mxu0 %v1355
        %1399 = vmatmul.bf16.gmra.mxu0 %v1389
        %v1400 = vpop.f32.mrf.mxu0
        %v1401 = vadd.f32 0.0, %v1400
        %v1402 = vpop.f32.mrf.mxu0
        %1403 = vdwg.mxu0
        %1404 = vmatpush.bf16.msra.mxu0 0
        %1405 = vmatpush.bf16.msra.mxu0 0
        %1406 = vmatpush.bf16.msra.mxu0 0
        %1407 = vmatpush.bf16.msra.mxu0 0
        %1408 = vmatpush.bf16.msra.mxu0 0
        %1409 = vmatpush.bf16.msra.mxu0 0
        %1410 = vmatpush.bf16.msra.mxu0 %v1364
        %1411 = vmatpush.bf16.msra.mxu0 %v1356
        %1412 = vmatmul.bf16.gmra.mxu0 %v1389
        %v1413 = vpop.f32.mrf.mxu0
        %v1414 = vadd.f32 0.0, %v1413
        %v1415 = vpop.f32.mrf.mxu0
        %1416 = vdwg.mxu0
        %1417 = vmatpush.bf16.msra.mxu0 0
        %1418 = vmatpush.bf16.msra.mxu0 0
        %1419 = vmatpush.bf16.msra.mxu0 0
        %1420 = vmatpush.bf16.msra.mxu0 0
        %1421 = vmatpush.bf16.msra.mxu0 0
        %1422 = vmatpush.bf16.msra.mxu0 0
        %1423 = vmatpush.bf16.msra.mxu0 %v1365
        %1424 = vmatpush.bf16.msra.mxu0 %v1357
        %1425 = vmatmul.bf16.gmra.mxu0 %v1389
        %v1426 = vpop.f32.mrf.mxu0
        %v1427 = vadd.f32 0.0, %v1426
        %v1428 = vpop.f32.mrf.mxu0
        %1429 = vdwg.mxu0
        %1430 = vmatpush.bf16.msra.mxu0 0
        %1431 = vmatpush.bf16.msra.mxu0 0
        %1432 = vmatpush.bf16.msra.mxu0 0
        %1433 = vmatpush.bf16.msra.mxu0 0
        %1434 = vmatpush.bf16.msra.mxu0 0
        %1435 = vmatpush.bf16.msra.mxu0 0
        %1436 = vmatpush.bf16.msra.mxu0 %v1366
        %1437 = vmatpush.bf16.msra.mxu0 %v1358
        %1438 = vmatmul.bf16.gmra.mxu0 %v1389
        %v1439 = vpop.f32.mrf.mxu0
        %v1440 = vadd.f32 0.0, %v1439
        %v1441 = vpop.f32.mrf.mxu0
        %1442 = vdwg.mxu0
        %1443 = vmatpush.bf16.msra.mxu0 0
        %1444 = vmatpush.bf16.msra.mxu0 0
        %1445 = vmatpush.bf16.msra.mxu0 0
        %1446 = vmatpush.bf16.msra.mxu0 0
        %1447 = vmatpush.bf16.msra.mxu0 0
        %1448 = vmatpush.bf16.msra.mxu0 0
        %1449 = vmatpush.bf16.msra.mxu0 %v1367
        %1450 = vmatpush.bf16.msra.mxu0 %v1359
        %1451 = vmatmul.bf16.gmra.mxu0 %v1389
        %v1452 = vpop.f32.mrf.mxu0
        %v1453 = vadd.f32 0.0, %v1452
        %v1454 = vpop.f32.mrf.mxu0
        %1455 = vdwg.mxu0
        %1456 = vmatpush.bf16.msra.mxu0 0
        %1457 = vmatpush.bf16.msra.mxu0 0
        %1458 = vmatpush.bf16.msra.mxu0 0
        %1459 = vmatpush.bf16.msra.mxu0 0
        %1460 = vmatpush.bf16.msra.mxu0 0
        %1461 = vmatpush.bf16.msra.mxu0 0
        %1462 = vmatpush.bf16.msra.mxu0 %v1368
        %1463 = vmatpush.bf16.msra.mxu0 %v1360
        %1464 = vmatmul.bf16.gmra.mxu0 %v1389
        %v1465 = vpop.f32.mrf.mxu0
        %v1466 = vadd.f32 0.0, %v1465
        %v1467 = vpop.f32.mrf.mxu0
        %1468 = vdwg.mxu0
        %1469 = vmatpush.bf16.msra.mxu0 0
        %1470 = vmatpush.bf16.msra.mxu0 0
        %1471 = vmatpush.bf16.msra.mxu0 0
        %1472 = vmatpush.bf16.msra.mxu0 0
        %1473 = vmatpush.bf16.msra.mxu0 0
        %1474 = vmatpush.bf16.msra.mxu0 0
        %1475 = vmatpush.bf16.msra.mxu0 %v1369
        %1476 = vmatpush.bf16.msra.mxu0 %v1361
        %1477 = vmatmul.bf16.gmra.mxu0 %v1389
        %v1478 = vpop.f32.mrf.mxu0
        %v1479 = vadd.f32 0.0, %v1478
        %v1480 = vpop.f32.mrf.mxu0
        %1481 = vdwg.mxu0
        %1482 = vmatpush.bf16.msra.mxu0 0
        %1483 = vmatpush.bf16.msra.mxu0 0
        %1484 = vmatpush.bf16.msra.mxu0 0
        %1485 = vmatpush.bf16.msra.mxu0 0
        %1486 = vmatpush.bf16.msra.mxu0 0
        %1487 = vmatpush.bf16.msra.mxu0 0
        %1488 = vmatpush.bf16.msra.mxu0 %v1370
        %1489 = vmatpush.bf16.msra.mxu0 %v1362
        %1490 = vmatmul.bf16.gmra.mxu0 %v1389
        %v1491 = vpop.f32.mrf.mxu0
        %v1492 = vadd.f32 0.0, %v1491
        %v1493 = vpop.f32.mrf.mxu0
        %1494 = vdwg.mxu0
        %v1495 = vld [vmem:[%s297] sm:$0x3]
        %v1496 = vpack.c.bf16 %v1495, %v1495
        %v1497 = vld [vmem:[%s3] sm:$0xff]
        %v1498 = vld [vmem:[%s3 + $0x8] sm:$0xff]
        %v1499 = vld [vmem:[%s3 + $0x10] sm:$0xff]
        %v1500 = vld [vmem:[%s3 + $0x18] sm:$0xff]
        %v1501 = vld [vmem:[%s3 + $0x20] sm:$0xff]
        %v1502 = vld [vmem:[%s3 + $0x28] sm:$0xff]
        %v1503 = vld [vmem:[%s3 + $0x30] sm:$0xff]
        %v1504 = vld [vmem:[%s3 + $0x38] sm:$0xff]
        %v1505 = vld [vmem:[%s3 + $0x40] sm:$0xff]
        %v1506 = vld [vmem:[%s3 + $0x48] sm:$0xff]
        %v1507 = vld [vmem:[%s3 + $0x50] sm:$0xff]
        %v1508 = vld [vmem:[%s3 + $0x58] sm:$0xff]
        %v1509 = vld [vmem:[%s3 + $0x60] sm:$0xff]
        %v1510 = vld [vmem:[%s3 + $0x68] sm:$0xff]
        %v1511 = vld [vmem:[%s3 + $0x70] sm:$0xff]
        %v1512 = vld [vmem:[%s3 + $0x78] sm:$0xff]
        %v1529 = vunpack.c.l.b16 %v1497
        %v1530 = vunpack.c.h.b16 %v1497
        %v1531 = vunpack.c.l.b16 %v1498
        %v1532 = vunpack.c.h.b16 %v1498
        %v1533 = vunpack.c.l.b16 %v1499
        %v1534 = vunpack.c.h.b16 %v1499
        %v1535 = vunpack.c.l.b16 %v1500
        %v1536 = vunpack.c.h.b16 %v1500
        %v1537 = vunpack.c.l.b16 %v1501
        %v1538 = vunpack.c.h.b16 %v1501
        %v1539 = vunpack.c.l.b16 %v1502
        %v1540 = vunpack.c.h.b16 %v1502
        %v1541 = vunpack.c.l.b16 %v1503
        %v1542 = vunpack.c.h.b16 %v1503
        %v1543 = vunpack.c.l.b16 %v1504
        %v1544 = vunpack.c.h.b16 %v1504
        %v1545 = vunpack.c.l.b16 %v1505
        %v1546 = vunpack.c.h.b16 %v1505
        %v1547 = vunpack.c.l.b16 %v1506
        %v1548 = vunpack.c.h.b16 %v1506
        %v1549 = vunpack.c.l.b16 %v1507
        %v1550 = vunpack.c.h.b16 %v1507
        %v1551 = vunpack.c.l.b16 %v1508
        %v1552 = vunpack.c.h.b16 %v1508
        %v1553 = vunpack.c.l.b16 %v1509
        %v1554 = vunpack.c.h.b16 %v1509
        %v1555 = vunpack.c.l.b16 %v1510
        %v1556 = vunpack.c.h.b16 %v1510
        %v1557 = vunpack.c.l.b16 %v1511
        %v1558 = vunpack.c.h.b16 %v1511
        %v1559 = vunpack.c.l.b16 %v1512
        %v1560 = vunpack.c.h.b16 %v1512
        %v1561 = vpack.c.b16 %v1537, %v1529
        %v1562 = vpack.c.b16 %v1538, %v1530
        %v1563 = vpack.c.b16 %v1539, %v1531
        %v1564 = vpack.c.b16 %v1540, %v1532
        %v1565 = vpack.c.b16 %v1541, %v1533
        %v1566 = vpack.c.b16 %v1542, %v1534
        %v1567 = vpack.c.b16 %v1543, %v1535
        %v1568 = vpack.c.b16 %v1544, %v1536
        %v1569 = vpack.c.b16 %v1553, %v1545
        %v1570 = vpack.c.b16 %v1554, %v1546
        %v1571 = vpack.c.b16 %v1555, %v1547
        %v1572 = vpack.c.b16 %v1556, %v1548
        %v1573 = vpack.c.b16 %v1557, %v1549
        %v1574 = vpack.c.b16 %v1558, %v1550
        %v1575 = vpack.c.b16 %v1559, %v1551
        %v1576 = vpack.c.b16 %v1560, %v1552
        %v1594 = vsel %vm1387, %v1496, 0
        %1596 = vmatpush.bf16.msra.mxu0 0
        %1597 = vmatpush.bf16.msra.mxu0 0
        %1598 = vmatpush.bf16.msra.mxu0 0
        %1599 = vmatpush.bf16.msra.mxu0 0
        %1600 = vmatpush.bf16.msra.mxu0 0
        %1601 = vmatpush.bf16.msra.mxu0 0
        %1602 = vmatpush.bf16.msra.mxu0 %v1569
        %1603 = vmatpush.bf16.msra.mxu0 %v1561
        %1604 = vmatmul.bf16.gmra.mxu0 %v1594
        %v1605 = vpop.f32.mrf.mxu0
        %v1606 = vadd.f32 0.0, %v1605
        %v1607 = vpop.f32.mrf.mxu0
        %1608 = vdwg.mxu0
        %1609 = vmatpush.bf16.msra.mxu0 0
        %1610 = vmatpush.bf16.msra.mxu0 0
        %1611 = vmatpush.bf16.msra.mxu0 0
        %1612 = vmatpush.bf16.msra.mxu0 0
        %1613 = vmatpush.bf16.msra.mxu0 0
        %1614 = vmatpush.bf16.msra.mxu0 0
        %1615 = vmatpush.bf16.msra.mxu0 %v1570
        %1616 = vmatpush.bf16.msra.mxu0 %v1562
        %1617 = vmatmul.bf16.gmra.mxu0 %v1594
        %v1618 = vpop.f32.mrf.mxu0
        %v1619 = vadd.f32 0.0, %v1618
        %v1620 = vpop.f32.mrf.mxu0
        %1621 = vdwg.mxu0
        %1622 = vmatpush.bf16.msra.mxu0 0
        %1623 = vmatpush.bf16.msra.mxu0 0
        %1624 = vmatpush.bf16.msra.mxu0 0
        %1625 = vmatpush.bf16.msra.mxu0 0
        %1626 = vmatpush.bf16.msra.mxu0 0
        %1627 = vmatpush.bf16.msra.mxu0 0
        %1628 = vmatpush.bf16.msra.mxu0 %v1571
        %1629 = vmatpush.bf16.msra.mxu0 %v1563
        %1630 = vmatmul.bf16.gmra.mxu0 %v1594
        %v1631 = vpop.f32.mrf.mxu0
        %v1632 = vadd.f32 0.0, %v1631
        %v1633 = vpop.f32.mrf.mxu0
        %1634 = vdwg.mxu0
        %1635 = vmatpush.bf16.msra.mxu0 0
        %1636 = vmatpush.bf16.msra.mxu0 0
        %1637 = vmatpush.bf16.msra.mxu0 0
        %1638 = vmatpush.bf16.msra.mxu0 0
        %1639 = vmatpush.bf16.msra.mxu0 0
        %1640 = vmatpush.bf16.msra.mxu0 0
        %1641 = vmatpush.bf16.msra.mxu0 %v1572
        %1642 = vmatpush.bf16.msra.mxu0 %v1564
        %1643 = vmatmul.bf16.gmra.mxu0 %v1594
        %v1644 = vpop.f32.mrf.mxu0
        %v1645 = vadd.f32 0.0, %v1644
        %v1646 = vpop.f32.mrf.mxu0
        %1647 = vdwg.mxu0
        %1648 = vmatpush.bf16.msra.mxu0 0
        %1649 = vmatpush.bf16.msra.mxu0 0
        %1650 = vmatpush.bf16.msra.mxu0 0
        %1651 = vmatpush.bf16.msra.mxu0 0
        %1652 = vmatpush.bf16.msra.mxu0 0
        %1653 = vmatpush.bf16.msra.mxu0 0
        %1654 = vmatpush.bf16.msra.mxu0 %v1573
        %1655 = vmatpush.bf16.msra.mxu0 %v1565
        %1656 = vmatmul.bf16.gmra.mxu0 %v1594
        %v1657 = vpop.f32.mrf.mxu0
        %v1658 = vadd.f32 0.0, %v1657
        %v1659 = vpop.f32.mrf.mxu0
        %1660 = vdwg.mxu0
        %1661 = vmatpush.bf16.msra.mxu0 0
        %1662 = vmatpush.bf16.msra.mxu0 0
        %1663 = vmatpush.bf16.msra.mxu0 0
        %1664 = vmatpush.bf16.msra.mxu0 0
        %1665 = vmatpush.bf16.msra.mxu0 0
        %1666 = vmatpush.bf16.msra.mxu0 0
        %1667 = vmatpush.bf16.msra.mxu0 %v1574
        %1668 = vmatpush.bf16.msra.mxu0 %v1566
        %1669 = vmatmul.bf16.gmra.mxu0 %v1594
        %v1670 = vpop.f32.mrf.mxu0
        %v1671 = vadd.f32 0.0, %v1670
        %v1672 = vpop.f32.mrf.mxu0
        %1673 = vdwg.mxu0
        %1674 = vmatpush.bf16.msra.mxu0 0
        %1675 = vmatpush.bf16.msra.mxu0 0
        %1676 = vmatpush.bf16.msra.mxu0 0
        %1677 = vmatpush.bf16.msra.mxu0 0
        %1678 = vmatpush.bf16.msra.mxu0 0
        %1679 = vmatpush.bf16.msra.mxu0 0
        %1680 = vmatpush.bf16.msra.mxu0 %v1575
        %1681 = vmatpush.bf16.msra.mxu0 %v1567
        %1682 = vmatmul.bf16.gmra.mxu0 %v1594
        %v1683 = vpop.f32.mrf.mxu0
        %v1684 = vadd.f32 0.0, %v1683
        %v1685 = vpop.f32.mrf.mxu0
        %1686 = vdwg.mxu0
        %1687 = vmatpush.bf16.msra.mxu0 0
        %1688 = vmatpush.bf16.msra.mxu0 0
        %1689 = vmatpush.bf16.msra.mxu0 0
        %1690 = vmatpush.bf16.msra.mxu0 0
        %1691 = vmatpush.bf16.msra.mxu0 0
        %1692 = vmatpush.bf16.msra.mxu0 0
        %1693 = vmatpush.bf16.msra.mxu0 %v1576
        %1694 = vmatpush.bf16.msra.mxu0 %v1568
        %1695 = vmatmul.bf16.gmra.mxu0 %v1594
        %v1696 = vpop.f32.mrf.mxu0
        %v1697 = vadd.f32 0.0, %v1696
        %v1698 = vpop.f32.mrf.mxu0
        %1699 = vdwg.mxu0
        %v1700 = vmul.f32 %v1401, %v1606
        %v1701 = vmul.f32 %v1414, %v1619
        %v1702 = vmul.f32 %v1427, %v1632
        %v1703 = vmul.f32 %v1440, %v1645
        %v1704 = vmul.f32 %v1453, %v1658
        %v1705 = vmul.f32 %v1466, %v1671
        %v1706 = vmul.f32 %v1479, %v1684
        %v1707 = vmul.f32 %v1492, %v1697
        %v1708 = vadd.f32 %v1700, 1.0
        %v1709 = vadd.f32 %v1701, 1.0
        %v1710 = vadd.f32 %v1702, 1.0
        %v1711 = vadd.f32 %v1703, 1.0
        %v1712 = vadd.f32 %v1704, 1.0
        %v1713 = vadd.f32 %v1705, 1.0
        %v1714 = vadd.f32 %v1706, 1.0
        %v1715 = vadd.f32 %v1707, 1.0
        %v1716 = vmul.f32 %v1104, %v1708
        %v1717 = vmul.f32 %v1130, %v1709
        %v1718 = vmul.f32 %v1156, %v1710
        %v1719 = vmul.f32 %v1182, %v1711
        %v1720 = vmul.f32 %v1208, %v1712
        %v1721 = vmul.f32 %v1234, %v1713
        %v1722 = vmul.f32 %v1260, %v1714
        %v1723 = vmul.f32 %v1286, %v1715
        %v1724 = vmin.f32 %v1716, 20.0
        %v1725 = vmin.f32 %v1717, 20.0
        %v1726 = vmin.f32 %v1718, 20.0
        %v1727 = vmin.f32 %v1719, 20.0
        %v1728 = vmin.f32 %v1720, 20.0
        %v1729 = vmin.f32 %v1721, 20.0
        %v1730 = vmin.f32 %v1722, 20.0
        %v1731 = vmin.f32 %v1723, 20.0
        %v1732 = vmul.f32 %v1724, 1.442695
        %v1733 = vpow.pop %v1732
        %v1734 = vmul.f32 %v1725, 1.442695
        %v1735 = vpow.pop %v1734
        %v1736 = vmul.f32 %v1726, 1.442695
        %v1737 = vpow.pop %v1736
        %v1738 = vmul.f32 %v1727, 1.442695
        %v1739 = vpow.pop %v1738
        %v1740 = vmul.f32 %v1728, 1.442695
        %v1741 = vpow.pop %v1740
        %v1742 = vmul.f32 %v1729, 1.442695
        %v1743 = vpow.pop %v1742
        %v1744 = vmul.f32 %v1730, 1.442695
        %v1745 = vpow.pop %v1744
        %v1746 = vmul.f32 %v1731, 1.442695
        %v1747 = vpow.pop %v1746
        %v1748 = vadd.f32 %v1733, 1.0
        %v1749 = vadd.f32 %v1735, 1.0
        %v1750 = vadd.f32 %v1737, 1.0
        %v1751 = vadd.f32 %v1739, 1.0
        %v1752 = vadd.f32 %v1741, 1.0
        %v1753 = vadd.f32 %v1743, 1.0
        %v1754 = vadd.f32 %v1745, 1.0
        %v1755 = vadd.f32 %v1747, 1.0
        %v1756 = vmul.f32 %v1748, %v1748
        %v1757 = vmul.f32 %v1749, %v1749
        %v1758 = vmul.f32 %v1750, %v1750
        %v1759 = vmul.f32 %v1751, %v1751
        %v1760 = vmul.f32 %v1752, %v1752
        %v1761 = vmul.f32 %v1753, %v1753
        %v1762 = vmul.f32 %v1754, %v1754
        %v1763 = vmul.f32 %v1755, %v1755
        %v1764 = vsub.f32 %v1756, 1.0
        %v1765 = vsub.f32 %v1757, 1.0
        %v1766 = vsub.f32 %v1758, 1.0
        %v1767 = vsub.f32 %v1759, 1.0
        %v1768 = vsub.f32 %v1760, 1.0
        %v1769 = vsub.f32 %v1761, 1.0
        %v1770 = vsub.f32 %v1762, 1.0
        %v1771 = vsub.f32 %v1763, 1.0
        %v1772 = vmul.f32 %v1716, %v1764
        %v1773 = vmul.f32 %v1717, %v1765
        %v1774 = vmul.f32 %v1718, %v1766
        %v1775 = vmul.f32 %v1719, %v1767
        %v1776 = vmul.f32 %v1720, %v1768
        %v1777 = vmul.f32 %v1721, %v1769
        %v1778 = vmul.f32 %v1722, %v1770
        %v1779 = vmul.f32 %v1723, %v1771
        %v1780 = vadd.f32 %v1756, 1.0
        %v1781 = vadd.f32 %v1757, 1.0
        %v1782 = vadd.f32 %v1758, 1.0
        %v1783 = vadd.f32 %v1759, 1.0
        %v1784 = vadd.f32 %v1760, 1.0
        %v1785 = vadd.f32 %v1761, 1.0
        %v1786 = vadd.f32 %v1762, 1.0
        %v1787 = vadd.f32 %v1763, 1.0
        %v1788 = vrcp.pop %v1780
        %v1789 = vrcp.pop %v1781
        %v1790 = vrcp.pop %v1782
        %v1791 = vrcp.pop %v1783
        %v1792 = vrcp.pop %v1784
        %v1793 = vrcp.pop %v1785
        %v1794 = vrcp.pop %v1786
        %v1795 = vrcp.pop %v1787
        %v1796 = vmul.f32 %v1772, %v1788
        %v1797 = vmul.f32 %v1773, %v1789
        %v1798 = vmul.f32 %v1774, %v1790
        %v1799 = vmul.f32 %v1775, %v1791
        %v1800 = vmul.f32 %v1776, %v1792
        %v1801 = vmul.f32 %v1777, %v1793
        %v1802 = vmul.f32 %v1778, %v1794
        %v1803 = vmul.f32 %v1779, %v1795
        %v1812 = vrot.slane %v1797, 6
        %v1813 = vrot.slane %v1798, 4
        %v1814 = vrot.slane %v1799, 2
        %v1815 = vrot.slane %v1801, 6
        %v1816 = vrot.slane %v1802, 4
        %v1817 = vrot.slane %v1803, 2
        %vm1818 = vcmask 1041408
        %v1819 = vsel %vm1818, %v1796, %v1812
        %vm1820 = vcmask 1045508
        %v1821 = vsel %vm1820, %v1813, %v1814
        %vm1822 = vcmask 1043456
        %v1823 = vsel %vm1822, %v1819, %v1821
        %v1824 = vsel %vm1818, %v1800, %v1815
        %v1825 = vsel %vm1820, %v1816, %v1817
        %v1826 = vsel %vm1822, %v1824, %v1825
        %1829 = vst [vmem:[%s302] sm:$0xff] %v1823
        %1830 = vst [vmem:[%s302 + $0x8] sm:$0xff] %v1826
        %p1831 = scmp.lt.s32.totalorder %s18, 3
        %s1832 = scalar_select %p1831, %s18, 3
        %s1833 = smul.addr %s1832, 8
        %s1834 = smul.addr %s1833, 2
        %s1835 = scalar_lea.vmem %s6, %s1834
        // Predicated region
        $region49: #{revolution_forward.3} parent=43 // pred_check
          %p1836 = pneg %p177
        $region50: #{revolution_forward.3} parent=43 // pred_check_branch
          %1838 = sbr.rel (%p1836) target = $region52
        $region51: #{revolution_forward.3} parent=43 // pred_region
          _
        $region52: #{revolution_forward.3} parent=43 // pred_fallthru
          _
      $region44: #{revolution_forward.3} parent=5 // pred_fallthru
        _
      %p1839 = scmp.le.s32.totalorder 2, %s13
      // Predicated region
      $region53: #{revolution_forward.3} parent=5 // pred_check
        %p1840 = pneg %p1839
      $region54: #{revolution_forward.3} parent=5 // pred_check_branch
        %1842 = sbr.rel (%p1840) target = $region56
      $region55: #{revolution_forward.3} parent=5 // pred_region
        %s1843 = ssub.s32 %s13, 2
        // Predicated region
        $region57: #{revolution_forward.3} parent=55 // pred_check
          %p1844 = pneg %p183
        $region58: #{revolution_forward.3} parent=55 // pred_check_branch
          %1846 = sbr.rel (%p1844) target = $region60
        $region59: #{revolution_forward.3} parent=55 // pred_region
          %p1847 = scmp.lt.s32.totalorder %s19, 3
          %s1848 = scalar_select %p1847, %s19, 3
          %s1849 = smul.addr %s1848, 8
          %s1850 = smul.addr %s1849, 2
          %s1851 = scalar_lea.vmem %s6, %s1850
        $region60: #{revolution_forward.3} parent=55 // pred_fallthru
          _
      $region56: #{revolution_forward.3} parent=5 // pred_fallthru
        _
    $region6: #{revolution_forward.3} parent=1 // loop_footer
      %s17 = sadd.s32 1, %s13
    $region7: #{revolution_forward.3} parent=1 // loop_footer_branch
      %12 = sbr.rel target = $region3
    $region8: #{revolution_forward.3} parent=1 // loop_exit
      _
    %1852 = vsyncpa [#allocation3], 1
    %s1853 = scalar_lea.sflag [#allocation3], 1
    %1854 = vsyncpa %s1853, 1

</llo_original>
